<compile_context>
chip_gen: v5e
topology: v5e:2x2
jax: 0.10.0
libtpu: 0.0.40
codegen_flags: <defaults>
</compile_context>

<pallas_src>
import jax
import jax.numpy as jnp
from jax.experimental import pallas as pl
from jax.experimental.pallas import tpu as pltpu


def _disc_kernel(x_ref, w1_ref, b1_ref, w2_ref, b2_ref, w3_ref, b3_ref, o_ref):
    # Layer 1: (TB, D)bf16 @ (D, 512)bf16 -> f32 acc, bias + LeakyReLU in f32
    h1 = jnp.dot(x_ref[...], w1_ref[...], preferred_element_type=jnp.float32)
    h1 = h1 + b1_ref[...]
    h1 = jnp.where(h1 > 0, h1, 0.2 * h1)

    # Layer 2: (TB, 512)bf16 @ (512, 256)bf16 -> f32 acc, bias + LeakyReLU in f32
    h2 = jnp.dot(h1.astype(jnp.bfloat16), w2_ref[...],
                 preferred_element_type=jnp.float32)
    h2 = h2 + b2_ref[...]
    h2 = jnp.where(h2 > 0, h2, 0.2 * h2)

    # Layer 3: (TB, 256)bf16 @ (256, 128-padded)bf16 -> f32, lane-dense store
    out = jnp.dot(h2.astype(jnp.bfloat16), w3_ref[...],
                  preferred_element_type=jnp.float32)
    o_ref[...] = out + b3_ref[...]


def _round_up(x, m):
    return ((x + m - 1) // m) * m


def prepare_params(params, out_pad=128):
    """One-time parameter prep: (in,out) weights -> bf16, biases -> (1,N) f32,
    and the final (256,1) layer padded to a lane-dense 128-wide slab."""
    w1, b1, w2, b2, w3, b3 = params
    w3p = jnp.zeros((w3.shape[0], out_pad), jnp.float32).at[:, :1].set(w3)
    b3p = jnp.zeros((1, out_pad), jnp.float32).at[:, :1].set(b3.reshape(1, 1))
    return (
        w1.astype(jnp.bfloat16),
        b1.reshape(1, -1).astype(jnp.float32),
        w2.astype(jnp.bfloat16),
        b2.reshape(1, -1).astype(jnp.float32),
        w3p.astype(jnp.bfloat16),
        b3p,  # bias stays f32 (added to f32 accumulator)
    )


def discriminator_forward(img, prepped):
    """img: (B, C, H, W). prepped: output of prepare_params. Returns (B, 1) f32."""
    w1, b1, w2, b2, w3p, b3p = prepped
    B = img.shape[0]
    D = w1.shape[0]
    H1, H2, OUT_PAD = w1.shape[1], w2.shape[1], w3p.shape[1]

    x = img.reshape(B, -1)
    assert x.shape[1] == D

    # Batch tile: 128 rows when the batch is large, otherwise the smallest
    # sublane-aligned tile covering B.  Pad B up to a multiple of the tile.
    TB = 128 if B >= 128 else _round_up(B, 8)
    B_pad = _round_up(B, TB)
    if B_pad != B:
        x = jnp.pad(x, ((0, B_pad - B), (0, 0)))
    x = x.astype(jnp.bfloat16)

    nb = B_pad // TB

    out_padded = pl.pallas_call(
        _disc_kernel,
        out_shape=jax.ShapeDtypeStruct((B_pad, OUT_PAD), jnp.float32),
        grid=(nb,),
        in_specs=[
            pl.BlockSpec((TB, D), lambda i: (i, 0)),      # x tile streams per step
            pl.BlockSpec((D, H1), lambda i: (0, 0)),      # weights: constant block,
            pl.BlockSpec((1, H1), lambda i: (0, 0)),      # VMEM-resident across tiles
            pl.BlockSpec((H1, H2), lambda i: (0, 0)),
            pl.BlockSpec((1, H2), lambda i: (0, 0)),
            pl.BlockSpec((H2, OUT_PAD), lambda i: (0, 0)),
            pl.BlockSpec((1, OUT_PAD), lambda i: (0, 0)),
        ],
        out_specs=pl.BlockSpec((TB, OUT_PAD), lambda i: (i, 0)),
        compiler_params=pltpu.CompilerParams(
            dimension_semantics=("parallel",),
        ),
    )(x, w1, b1, w2, b2, w3p, b3p)

    return out_padded[:B, :1]


def init_params(key, in_features):
    """Deterministic init mirroring PyTorch nn.Linear default bounds
    U(-1/sqrt(fan_in), 1/sqrt(fan_in)); weights stored as (in, out)."""
    dims = [(in_features, 512), (512, 256), (256, 1)]
    params = []
    for (fan_in, fan_out) in dims:
        key, kw, kb = jax.random.split(key, 3)
        bound = 1.0 / (fan_in ** 0.5)
        w = jax.random.uniform(kw, (fan_in, fan_out), jnp.float32, -bound, bound)
        b = jax.random.uniform(kb, (fan_out,), jnp.float32, -bound, bound)
        params.extend([w, b])
    return tuple(params)


if __name__ == "__main__":
    # Small shapes consistent with the module: img_shape = (C, H, W) = (4, 16, 16)
    B, C, H, W = 2, 4, 16, 16
    in_features = C * H * W  # 1024

    key = jax.random.PRNGKey(0)
    key, k_img = jax.random.split(key)
    img = jax.random.normal(k_img, (B, C, H, W), jnp.float32)

    params = init_params(key, in_features)
    prepped = prepare_params(params)

    validity = discriminator_forward(img, prepped)
    validity = jax.block_until_ready(validity)
    assert validity.shape == (B, 1), validity.shape

    # Reference 1: same bf16 inputs / f32 accumulation in plain JAX (tight check)
    w1p, b1p, w2p, b2p, w3p, b3p = prepped
    xb = img.reshape(B, -1).astype(jnp.bfloat16)
    h = jnp.dot(xb, w1p, preferred_element_type=jnp.float32) + b1p
    h = jnp.where(h > 0, h, 0.2 * h)
    h = jnp.dot(h.astype(jnp.bfloat16), w2p, preferred_element_type=jnp.float32) + b2p
    h = jnp.where(h > 0, h, 0.2 * h)
    ref_bf16 = (jnp.dot(h.astype(jnp.bfloat16), w3p,
                        preferred_element_type=jnp.float32) + b3p)[:, :1]
    assert jnp.allclose(validity, ref_bf16, atol=2e-2, rtol=2e-2)

    # Reference 2: full f32 PyTorch-equivalent math (loose check, bf16 drift)
    w1, b1, w2, b2, w3, b3 = params
    xf = img.reshape(B, -1)
    hf = xf @ w1 + b1
    hf = jnp.where(hf > 0, hf, 0.2 * hf)
    hf = hf @ w2 + b2
    hf = jnp.where(hf > 0, hf, 0.2 * hf)
    ref_f32 = hf @ w3 + b3
    assert jnp.allclose(validity, ref_f32, atol=1e-1, rtol=1e-1)

    print("KERNEL_OK")
</pallas_src>

<mosaic_0001>
module attributes {stable_mosaic.version = 11 : i64} {
  func.func @_disc_kernel(%arg0: i32, %arg1: memref<8x1024xbf16, #tpu.memory_space<vmem>>, %arg2: memref<1024x512xbf16, #tpu.memory_space<vmem>>, %arg3: memref<1x512xf32, #tpu.memory_space<vmem>>, %arg4: memref<512x256xbf16, #tpu.memory_space<vmem>>, %arg5: memref<1x256xf32, #tpu.memory_space<vmem>>, %arg6: memref<256x128xbf16, #tpu.memory_space<vmem>>, %arg7: memref<1x128xf32, #tpu.memory_space<vmem>>, %arg8: memref<8x128xf32, #tpu.memory_space<vmem>>) attributes {dimension_semantics = [#tpu.dimension_semantics<parallel>], iteration_bounds = array<i64: 1>, scalar_prefetch = 0 : i64, scratch_operands = 0 : i64, tpu.core_type = #tpu.core_type<tc>, window_params = [{transform_indices = @transform_0, window_bounds = array<i64: 8, 1024>}, {pipeline_mode = #tpu.pipeline_mode<synchronous>, transform_indices = @transform_1, window_bounds = array<i64: 1024, 512>}, {pipeline_mode = #tpu.pipeline_mode<synchronous>, transform_indices = @transform_2, window_bounds = array<i64: 1, 512>}, {pipeline_mode = #tpu.pipeline_mode<synchronous>, transform_indices = @transform_3, window_bounds = array<i64: 512, 256>}, {pipeline_mode = #tpu.pipeline_mode<synchronous>, transform_indices = @transform_4, window_bounds = array<i64: 1, 256>}, {pipeline_mode = #tpu.pipeline_mode<synchronous>, transform_indices = @transform_5, window_bounds = array<i64: 256, 128>}, {pipeline_mode = #tpu.pipeline_mode<synchronous>, transform_indices = @transform_6, window_bounds = array<i64: 1, 128>}, {transform_indices = @transform_7, window_bounds = array<i64: 8, 128>}]} {
    %c0 = arith.constant 0 : index
    %c0_0 = arith.constant 0 : index
    %0 = vector.load %arg1[%c0, %c0_0] : memref<8x1024xbf16, #tpu.memory_space<vmem>>, vector<8x1024xbf16>
    %c0_1 = arith.constant 0 : index
    %c0_2 = arith.constant 0 : index
    %1 = vector.load %arg2[%c0_1, %c0_2] : memref<1024x512xbf16, #tpu.memory_space<vmem>>, vector<1024x512xbf16>
    %cst = arith.constant dense<0.000000e+00> : vector<8x512xf32>
    %2 = tpu.matmul %0, %1, %cst {dimension_numbers = #tpu.dot_dimension_numbers<[1], [0], [0], [1], [0, 0, 1, 1], [], []>} : vector<8x1024xbf16>, vector<1024x512xbf16>, vector<8x512xf32> -> vector<8x512xf32>
    %c0_3 = arith.constant 0 : index
    %c0_4 = arith.constant 0 : index
    %3 = vector.load %arg3[%c0_3, %c0_4] : memref<1x512xf32, #tpu.memory_space<vmem>>, vector<1x512xf32>
    %4 = vector.broadcast %3 : vector<1x512xf32> to vector<8x512xf32>
    %5 = arith.addf %2, %4 : vector<8x512xf32>
    %cst_5 = arith.constant 0.000000e+00 : f32
    %6 = vector.broadcast %cst_5 : f32 to vector<8x512xf32>
    %7 = arith.cmpf ogt, %5, %6 : vector<8x512xf32>
    %cst_6 = arith.constant 2.000000e-01 : f32
    %8 = vector.broadcast %cst_6 : f32 to vector<8x512xf32>
    %9 = arith.mulf %8, %5 : vector<8x512xf32>
    %10 = arith.select %7, %5, %9 : vector<8x512xi1>, vector<8x512xf32>
    %11 = arith.truncf %10 : vector<8x512xf32> to vector<8x512xbf16>
    %c0_7 = arith.constant 0 : index
    %c0_8 = arith.constant 0 : index
    %12 = vector.load %arg4[%c0_7, %c0_8] : memref<512x256xbf16, #tpu.memory_space<vmem>>, vector<512x256xbf16>
    %cst_9 = arith.constant dense<0.000000e+00> : vector<8x256xf32>
    %13 = tpu.matmul %11, %12, %cst_9 {dimension_numbers = #tpu.dot_dimension_numbers<[1], [0], [0], [1], [0, 0, 1, 1], [], []>} : vector<8x512xbf16>, vector<512x256xbf16>, vector<8x256xf32> -> vector<8x256xf32>
    %c0_10 = arith.constant 0 : index
    %c0_11 = arith.constant 0 : index
    %14 = vector.load %arg5[%c0_10, %c0_11] : memref<1x256xf32, #tpu.memory_space<vmem>>, vector<1x256xf32>
    %15 = vector.broadcast %14 : vector<1x256xf32> to vector<8x256xf32>
    %16 = arith.addf %13, %15 : vector<8x256xf32>
    %cst_12 = arith.constant 0.000000e+00 : f32
    %17 = vector.broadcast %cst_12 : f32 to vector<8x256xf32>
    %18 = arith.cmpf ogt, %16, %17 : vector<8x256xf32>
    %cst_13 = arith.constant 2.000000e-01 : f32
    %19 = vector.broadcast %cst_13 : f32 to vector<8x256xf32>
    %20 = arith.mulf %19, %16 : vector<8x256xf32>
    %21 = arith.select %18, %16, %20 : vector<8x256xi1>, vector<8x256xf32>
    %22 = arith.truncf %21 : vector<8x256xf32> to vector<8x256xbf16>
    %c0_14 = arith.constant 0 : index
    %c0_15 = arith.constant 0 : index
    %23 = vector.load %arg6[%c0_14, %c0_15] : memref<256x128xbf16, #tpu.memory_space<vmem>>, vector<256x128xbf16>
    %cst_16 = arith.constant dense<0.000000e+00> : vector<8x128xf32>
    %24 = tpu.matmul %22, %23, %cst_16 {dimension_numbers = #tpu.dot_dimension_numbers<[1], [0], [0], [1], [0, 0, 1, 1], [], []>} : vector<8x256xbf16>, vector<256x128xbf16>, vector<8x128xf32> -> vector<8x128xf32>
    %c0_17 = arith.constant 0 : index
    %c0_18 = arith.constant 0 : index
    %25 = vector.load %arg7[%c0_17, %c0_18] : memref<1x128xf32, #tpu.memory_space<vmem>>, vector<1x128xf32>
    %26 = vector.broadcast %25 : vector<1x128xf32> to vector<8x128xf32>
    %27 = arith.addf %24, %26 : vector<8x128xf32>
    %c0_19 = arith.constant 0 : index
    %c0_20 = arith.constant 0 : index
    %28 = vector.load %arg8[%c0_19, %c0_20] : memref<8x128xf32, #tpu.memory_space<vmem>>, vector<8x128xf32>
    tpu.vector_store %arg8[%c0_19, %c0_20], %27 {strides = array<i32>} : memref<8x128xf32, #tpu.memory_space<vmem>>, vector<8x128xf32>,
    return
  }
  func.func @transform_0(%arg0: i32) -> (i32, i32) {
    %c0_i32 = arith.constant 0 : i32
    %c0_i32_0 = arith.constant 0 : i32
    return %arg0, %c0_i32 : i32, i32
  }
  func.func @transform_1(%arg0: i32) -> (i32, i32) {
    %c0_i32 = arith.constant 0 : i32
    %c0_i32_0 = arith.constant 0 : i32
    %c0_i32_1 = arith.constant 0 : i32
    return %c0_i32, %c0_i32_0 : i32, i32
  }
  func.func @transform_2(%arg0: i32) -> (i32, i32) {
    %c0_i32 = arith.constant 0 : i32
    %c0_i32_0 = arith.constant 0 : i32
    %c0_i32_1 = arith.constant 0 : i32
    return %c0_i32, %c0_i32_0 : i32, i32
  }
  func.func @transform_3(%arg0: i32) -> (i32, i32) {
    %c0_i32 = arith.constant 0 : i32
    %c0_i32_0 = arith.constant 0 : i32
    %c0_i32_1 = arith.constant 0 : i32
    return %c0_i32, %c0_i32_0 : i32, i32
  }
  func.func @transform_4(%arg0: i32) -> (i32, i32) {
    %c0_i32 = arith.constant 0 : i32
    %c0_i32_0 = arith.constant 0 : i32
    %c0_i32_1 = arith.constant 0 : i32
    return %c0_i32, %c0_i32_0 : i32, i32
  }
  func.func @transform_5(%arg0: i32) -> (i32, i32) {
    %c0_i32 = arith.constant 0 : i32
    %c0_i32_0 = arith.constant 0 : i32
    %c0_i32_1 = arith.constant 0 : i32
    return %c0_i32, %c0_i32_0 : i32, i32
  }
  func.func @transform_6(%arg0: i32) -> (i32, i32) {
    %c0_i32 = arith.constant 0 : i32
    %c0_i32_0 = arith.constant 0 : i32
    %c0_i32_1 = arith.constant 0 : i32
    return %c0_i32, %c0_i32_0 : i32, i32
  }
  func.func @transform_7(%arg0: i32) -> (i32, i32) {
    %c0_i32 = arith.constant 0 : i32
    %c0_i32_0 = arith.constant 0 : i32
    return %arg0, %c0_i32 : i32, i32
  }
}

</mosaic_0001>

<llo_original>
// kernel: tpu_custom_call.1
$region0: #{tpu_custom_call.1}
  #allocation0 [shape = 'u32[]', space=smem, size = 0x4, offset = 0x4, fixed_abs, tag = 'smem constant byte address 0x4 - core index']
  #allocation1 [shape = 'u32[72,128]{1,0:T(1,128)}', space=vmem, size = 0x9000, scoped, tag = 'internal scratch']
  %s0 = inlined_call_operand.hbm [shape: bf16[8,1024], index: 0, kind: input, shape index: {}]
  %s1 = inlined_call_operand.hbm [shape: bf16[1024,512], index: 1, kind: input, shape index: {}]
  %s2 = inlined_call_operand.hbm [shape: f32[1,512], index: 2, kind: input, shape index: {}]
  %s3 = inlined_call_operand.hbm [shape: bf16[512,256], index: 3, kind: input, shape index: {}]
  %s4 = inlined_call_operand.vmem [shape: f32[1,256], index: 4, kind: input, shape index: {}]
  %s5 = inlined_call_operand.hbm [shape: bf16[256,128], index: 5, kind: input, shape index: {}]
  %s6 = inlined_call_operand.vmem [shape: f32[1,128], index: 6, kind: input, shape index: {}]
  %s7 = inlined_call_operand.hbm [shape: f32[8,128], index: 7, kind: output, shape index: {}]
  %s8 = sld [smem:[#allocation0]]
  $region58: #{tpu_custom_call.1} parent=0
    _
  %s10 = ssub.s32 1, %s8
  %s11 = scalar_select 0, %s10, %s8
  $region1: #{tpu_custom_call.1} parent=0
    #allocation2 [shape = 'u8[16384]{0}', space=vmem, size = 0x4000, scoped, tag = 'input window, operand 0, single buffered']
    #allocation3 [shape = 's32[1]{0}', space=sflag, size = 0x4, scoped, tag = 'scoped memory for tpu_custom_call.1']
    #allocation4 [shape = 's32[1]{0}', space=sflag, size = 0x4, scoped, tag = 'scoped memory for tpu_custom_call.1']
    #allocation5 [shape = 'u8[1048576]{0}', space=vmem, size = 0x100000, scoped, tag = 'input window, operand 1, single buffered']
    #allocation6 [shape = 's32[1]{0}', space=sflag, size = 0x4, scoped, tag = 'scoped memory for tpu_custom_call.1']
    #allocation7 [shape = 'u8[2048]{0}', space=vmem, size = 0x800, scoped, tag = 'input window, operand 2, single buffered']
    #allocation8 [shape = 'u8[262144]{0}', space=vmem, size = 0x40000, scoped, tag = 'input window, operand 3, single buffered']
    #allocation9 [shape = 's32[1]{0}', space=sflag, size = 0x4, scoped, tag = 'scoped memory for tpu_custom_call.1']
    #allocation10 [shape = 'u8[65536]{0}', space=vmem, size = 0x10000, scoped, tag = 'input window, operand 5, single buffered']
    #allocation11 [shape = 'u8[4096]{0}', space=vmem, size = 0x1000, scoped, tag = 'output window, operand 0, single buffered']
    %12 = vsyncpa [#allocation3], 0
    %13 = vsyncpa [#allocation6], 0
    %14 = vsyncpa [#allocation9], 0
    %15 = vsyncpa [#allocation4], 0
    // Predicated region
    $region2: #{tpu_custom_call.1} parent=1 // pred_check
      _
    $region3: #{tpu_custom_call.1} parent=1 // pred_check_branch
      %17 = sbr.rel (0) target = $region5
    $region4: #{tpu_custom_call.1} parent=1 // pred_region
      %19 = vsyncadd [#allocation3], 0
      %s21 = sshll.u32 %s0, 4
      %s22 = int_to_ptr.hbm [resolvable:$true] %s21
      %s23 = sshll.u32 [#allocation2], 4
      %s24 = int_to_ptr.vmem [resolvable:$true] %s23
      %26 = dma.hbm_to_vmem [thread:$0]  %s22, 512, %s24, [#allocation3]
    $region5: #{tpu_custom_call.1} parent=1 // pred_fallthru
      _
    // Predicated region
    $region6: #{tpu_custom_call.1} parent=1 // pred_check
      _
    $region7: #{tpu_custom_call.1} parent=1 // pred_check_branch
      %28 = sbr.rel (0) target = $region9
    $region8: #{tpu_custom_call.1} parent=1 // pred_region
      %30 = vsyncadd [#allocation6], 0
      %s31 = sshll.u32 %s1, 4
      %s32 = int_to_ptr.hbm [resolvable:$true] %s31
      %s33 = sshll.u32 [#allocation5], 4
      %s34 = int_to_ptr.vmem [resolvable:$true] %s33
      %39 = dma.hbm_to_vmem [thread:$0]  %s32, 32768, %s34, [#allocation6], 256, 256, 16
    $region9: #{tpu_custom_call.1} parent=1 // pred_fallthru
      _
    // Predicated region
    $region10: #{tpu_custom_call.1} parent=1 // pred_check
      _
    $region11: #{tpu_custom_call.1} parent=1 // pred_check_branch
      %41 = sbr.rel (0) target = $region13
    $region12: #{tpu_custom_call.1} parent=1 // pred_region
      %43 = vsyncadd [#allocation6], 0
      %s45 = sshll.u32 %s2, 4
      %s46 = int_to_ptr.hbm [resolvable:$true] %s45
      %s47 = sshll.u32 [#allocation7], 4
      %s48 = int_to_ptr.vmem [resolvable:$true] %s47
      %50 = dma.hbm_to_vmem [thread:$0]  %s46, 64, %s48, [#allocation6]
    $region13: #{tpu_custom_call.1} parent=1 // pred_fallthru
      _
    // Predicated region
    $region14: #{tpu_custom_call.1} parent=1 // pred_check
      _
    $region15: #{tpu_custom_call.1} parent=1 // pred_check_branch
      %52 = sbr.rel (0) target = $region17
    $region16: #{tpu_custom_call.1} parent=1 // pred_region
      %54 = vsyncadd [#allocation9], 0
      %s55 = sshll.u32 %s3, 4
      %s56 = int_to_ptr.hbm [resolvable:$true] %s55
      %s57 = sshll.u32 [#allocation8], 4
      %s58 = int_to_ptr.vmem [resolvable:$true] %s57
      %63 = dma.hbm_to_vmem [thread:$0]  %s56, 8192, %s58, [#allocation9], 128, 128, 8
    $region17: #{tpu_custom_call.1} parent=1 // pred_fallthru
      _
    // Predicated region
    $region18: #{tpu_custom_call.1} parent=1 // pred_check
      _
    $region19: #{tpu_custom_call.1} parent=1 // pred_check_branch
      %65 = sbr.rel (0) target = $region21
    $region20: #{tpu_custom_call.1} parent=1 // pred_region
      _
    $region21: #{tpu_custom_call.1} parent=1 // pred_fallthru
      _
    // Predicated region
    $region22: #{tpu_custom_call.1} parent=1 // pred_check
      _
    $region23: #{tpu_custom_call.1} parent=1 // pred_check_branch
      %67 = sbr.rel (0) target = $region25
    $region24: #{tpu_custom_call.1} parent=1 // pred_region
      %69 = vsyncadd [#allocation9], 0
      %s70 = sshll.u32 %s5, 4
      %s71 = int_to_ptr.hbm [resolvable:$true] %s70
      %s72 = sshll.u32 [#allocation10], 4
      %s73 = int_to_ptr.vmem [resolvable:$true] %s72
      %78 = dma.hbm_to_vmem [thread:$0]  %s71, 2048, %s73, [#allocation9], 64, 64, 4
    $region25: #{tpu_custom_call.1} parent=1 // pred_fallthru
      _
    // Predicated region
    $region26: #{tpu_custom_call.1} parent=1 // pred_check
      _
    $region27: #{tpu_custom_call.1} parent=1 // pred_check_branch
      %80 = sbr.rel (0) target = $region29
    $region28: #{tpu_custom_call.1} parent=1 // pred_region
      _
    $region29: #{tpu_custom_call.1} parent=1 // pred_fallthru
      _
    // Predicated region
    $region30: #{tpu_custom_call.1} parent=1 // pred_check
      _
    $region31: #{tpu_custom_call.1} parent=1 // pred_check_branch
      %82 = sbr.rel (0) target = $region33
    $region32: #{tpu_custom_call.1} parent=1 // pred_region
      %84 = dma.done [#allocation3], 512
    $region33: #{tpu_custom_call.1} parent=1 // pred_fallthru
      _
    // Predicated region
    $region34: #{tpu_custom_call.1} parent=1 // pred_check
      _
    $region35: #{tpu_custom_call.1} parent=1 // pred_check_branch
      %86 = sbr.rel (0) target = $region37
    $region36: #{tpu_custom_call.1} parent=1 // pred_region
      %88 = dma.done [#allocation6], 32768
    $region37: #{tpu_custom_call.1} parent=1 // pred_fallthru
      _
    // Predicated region
    $region38: #{tpu_custom_call.1} parent=1 // pred_check
      _
    $region39: #{tpu_custom_call.1} parent=1 // pred_check_branch
      %90 = sbr.rel (0) target = $region41
    $region40: #{tpu_custom_call.1} parent=1 // pred_region
      %92 = dma.done [#allocation6], 64
    $region41: #{tpu_custom_call.1} parent=1 // pred_fallthru
      _
    // Predicated region
    $region42: #{tpu_custom_call.1} parent=1 // pred_check
      _
    $region43: #{tpu_custom_call.1} parent=1 // pred_check_branch
      %94 = sbr.rel (0) target = $region45
    $region44: #{tpu_custom_call.1} parent=1 // pred_region
      %96 = dma.done [#allocation9], 8192
    $region45: #{tpu_custom_call.1} parent=1 // pred_fallthru
      _
    // Predicated region
    $region46: #{tpu_custom_call.1} parent=1 // pred_check
      _
    $region47: #{tpu_custom_call.1} parent=1 // pred_check_branch
      %98 = sbr.rel (0) target = $region49
    $region48: #{tpu_custom_call.1} parent=1 // pred_region
      %100 = dma.done [#allocation9], 2048
    $region49: #{tpu_custom_call.1} parent=1 // pred_fallthru
      _
    %v101 = vld [vmem:[#allocation2] sm:$0xff]
    %v102 = vld [vmem:[#allocation2 + $0x8] sm:$0xff]
    %v103 = vld [vmem:[#allocation2 + $0x10] sm:$0xff]
    %v104 = vld [vmem:[#allocation2 + $0x18] sm:$0xff]
    %v105 = vld [vmem:[#allocation5] sm:$0xff]
    %v106 = vld [vmem:[#allocation5 + $0x8] sm:$0xff]
    %v107 = vld [vmem:[#allocation5 + $0x10] sm:$0xff]
    %v108 = vld [vmem:[#allocation5 + $0x18] sm:$0xff]
    %v109 = vld [vmem:[#allocation5 + $0x20] sm:$0xff]
    %v110 = vld [vmem:[#allocation5 + $0x28] sm:$0xff]
    %v111 = vld [vmem:[#allocation5 + $0x30] sm:$0xff]
    %v112 = vld [vmem:[#allocation5 + $0x38] sm:$0xff]
    %v113 = vld [vmem:[#allocation5 + $0x40] sm:$0xff]
    %v114 = vld [vmem:[#allocation5 + $0x48] sm:$0xff]
    %v115 = vld [vmem:[#allocation5 + $0x50] sm:$0xff]
    %v116 = vld [vmem:[#allocation5 + $0x58] sm:$0xff]
    %v117 = vld [vmem:[#allocation5 + $0x60] sm:$0xff]
    %v118 = vld [vmem:[#allocation5 + $0x68] sm:$0xff]
    %v119 = vld [vmem:[#allocation5 + $0x70] sm:$0xff]
    %v120 = vld [vmem:[#allocation5 + $0x78] sm:$0xff]
    %v121 = vld [vmem:[#allocation5 + $0x80] sm:$0xff]
    %v122 = vld [vmem:[#allocation5 + $0x88] sm:$0xff]
    %v123 = vld [vmem:[#allocation5 + $0x90] sm:$0xff]
    %v124 = vld [vmem:[#allocation5 + $0x98] sm:$0xff]
    %v125 = vld [vmem:[#allocation5 + $0xa0] sm:$0xff]
    %v126 = vld [vmem:[#allocation5 + $0xa8] sm:$0xff]
    %v127 = vld [vmem:[#allocation5 + $0xb0] sm:$0xff]
    %v128 = vld [vmem:[#allocation5 + $0xb8] sm:$0xff]
    %v129 = vld [vmem:[#allocation5 + $0xc0] sm:$0xff]
    %v130 = vld [vmem:[#allocation5 + $0xc8] sm:$0xff]
    %v131 = vld [vmem:[#allocation5 + $0xd0] sm:$0xff]
    %v132 = vld [vmem:[#allocation5 + $0xd8] sm:$0xff]
    %v133 = vld [vmem:[#allocation5 + $0xe0] sm:$0xff]
    %v134 = vld [vmem:[#allocation5 + $0xe8] sm:$0xff]
    %v135 = vld [vmem:[#allocation5 + $0xf0] sm:$0xff]
    %v136 = vld [vmem:[#allocation5 + $0xf8] sm:$0xff]
    %v137 = vld [vmem:[#allocation5 + $0x100] sm:$0xff]
    %v138 = vld [vmem:[#allocation5 + $0x108] sm:$0xff]
    %v139 = vld [vmem:[#allocation5 + $0x110] sm:$0xff]
    %v140 = vld [vmem:[#allocation5 + $0x118] sm:$0xff]
    %v141 = vld [vmem:[#allocation5 + $0x120] sm:$0xff]
    %v142 = vld [vmem:[#allocation5 + $0x128] sm:$0xff]
    %v143 = vld [vmem:[#allocation5 + $0x130] sm:$0xff]
    %v144 = vld [vmem:[#allocation5 + $0x138] sm:$0xff]
    %v145 = vld [vmem:[#allocation5 + $0x140] sm:$0xff]
    %v146 = vld [vmem:[#allocation5 + $0x148] sm:$0xff]
    %v147 = vld [vmem:[#allocation5 + $0x150] sm:$0xff]
    %v148 = vld [vmem:[#allocation5 + $0x158] sm:$0xff]
    %v149 = vld [vmem:[#allocation5 + $0x160] sm:$0xff]
    %v150 = vld [vmem:[#allocation5 + $0x168] sm:$0xff]
    %v151 = vld [vmem:[#allocation5 + $0x170] sm:$0xff]
    %v152 = vld [vmem:[#allocation5 + $0x178] sm:$0xff]
    %v153 = vld [vmem:[#allocation5 + $0x180] sm:$0xff]
    %v154 = vld [vmem:[#allocation5 + $0x188] sm:$0xff]
    %v155 = vld [vmem:[#allocation5 + $0x190] sm:$0xff]
    %v156 = vld [vmem:[#allocation5 + $0x198] sm:$0xff]
    %v157 = vld [vmem:[#allocation5 + $0x1a0] sm:$0xff]
    %v158 = vld [vmem:[#allocation5 + $0x1a8] sm:$0xff]
    %v159 = vld [vmem:[#allocation5 + $0x1b0] sm:$0xff]
    %v160 = vld [vmem:[#allocation5 + $0x1b8] sm:$0xff]
    %v161 = vld [vmem:[#allocation5 + $0x1c0] sm:$0xff]
    %v162 = vld [vmem:[#allocation5 + $0x1c8] sm:$0xff]
    %v163 = vld [vmem:[#allocation5 + $0x1d0] sm:$0xff]
    %v164 = vld [vmem:[#allocation5 + $0x1d8] sm:$0xff]
    %v165 = vld [vmem:[#allocation5 + $0x1e0] sm:$0xff]
    %v166 = vld [vmem:[#allocation5 + $0x1e8] sm:$0xff]
    %v167 = vld [vmem:[#allocation5 + $0x1f0] sm:$0xff]
    %v168 = vld [vmem:[#allocation5 + $0x1f8] sm:$0xff]
    %v169 = vld [vmem:[#allocation5 + $0x200] sm:$0xff]
    %v170 = vld [vmem:[#allocation5 + $0x208] sm:$0xff]
    %v171 = vld [vmem:[#allocation5 + $0x210] sm:$0xff]
    %v172 = vld [vmem:[#allocation5 + $0x218] sm:$0xff]
    %v173 = vld [vmem:[#allocation5 + $0x220] sm:$0xff]
    %v174 = vld [vmem:[#allocation5 + $0x228] sm:$0xff]
    %v175 = vld [vmem:[#allocation5 + $0x230] sm:$0xff]
    %v176 = vld [vmem:[#allocation5 + $0x238] sm:$0xff]
    %v177 = vld [vmem:[#allocation5 + $0x240] sm:$0xff]
    %v178 = vld [vmem:[#allocation5 + $0x248] sm:$0xff]
    %v179 = vld [vmem:[#allocation5 + $0x250] sm:$0xff]
    %v180 = vld [vmem:[#allocation5 + $0x258] sm:$0xff]
    %v181 = vld [vmem:[#allocation5 + $0x260] sm:$0xff]
    %v182 = vld [vmem:[#allocation5 + $0x268] sm:$0xff]
    %v183 = vld [vmem:[#allocation5 + $0x270] sm:$0xff]
    %v184 = vld [vmem:[#allocation5 + $0x278] sm:$0xff]
    %v185 = vld [vmem:[#allocation5 + $0x280] sm:$0xff]
    %v186 = vld [vmem:[#allocation5 + $0x288] sm:$0xff]
    %v187 = vld [vmem:[#allocation5 + $0x290] sm:$0xff]
    %v188 = vld [vmem:[#allocation5 + $0x298] sm:$0xff]
    %v189 = vld [vmem:[#allocation5 + $0x2a0] sm:$0xff]
    %v190 = vld [vmem:[#allocation5 + $0x2a8] sm:$0xff]
    %v191 = vld [vmem:[#allocation5 + $0x2b0] sm:$0xff]
    %v192 = vld [vmem:[#allocation5 + $0x2b8] sm:$0xff]
    %v193 = vld [vmem:[#allocation5 + $0x2c0] sm:$0xff]
    %v194 = vld [vmem:[#allocation5 + $0x2c8] sm:$0xff]
    %v195 = vld [vmem:[#allocation5 + $0x2d0] sm:$0xff]
    %v196 = vld [vmem:[#allocation5 + $0x2d8] sm:$0xff]
    %v197 = vld [vmem:[#allocation5 + $0x2e0] sm:$0xff]
    %v198 = vld [vmem:[#allocation5 + $0x2e8] sm:$0xff]
    %v199 = vld [vmem:[#allocation5 + $0x2f0] sm:$0xff]
    %v200 = vld [vmem:[#allocation5 + $0x2f8] sm:$0xff]
    %v201 = vld [vmem:[#allocation5 + $0x300] sm:$0xff]
    %v202 = vld [vmem:[#allocation5 + $0x308] sm:$0xff]
    %v203 = vld [vmem:[#allocation5 + $0x310] sm:$0xff]
    %v204 = vld [vmem:[#allocation5 + $0x318] sm:$0xff]
    %v205 = vld [vmem:[#allocation5 + $0x320] sm:$0xff]
    %v206 = vld [vmem:[#allocation5 + $0x328] sm:$0xff]
    %v207 = vld [vmem:[#allocation5 + $0x330] sm:$0xff]
    %v208 = vld [vmem:[#allocation5 + $0x338] sm:$0xff]
    %v209 = vld [vmem:[#allocation5 + $0x340] sm:$0xff]
    %v210 = vld [vmem:[#allocation5 + $0x348] sm:$0xff]
    %v211 = vld [vmem:[#allocation5 + $0x350] sm:$0xff]
    %v212 = vld [vmem:[#allocation5 + $0x358] sm:$0xff]
    %v213 = vld [vmem:[#allocation5 + $0x360] sm:$0xff]
    %v214 = vld [vmem:[#allocation5 + $0x368] sm:$0xff]
    %v215 = vld [vmem:[#allocation5 + $0x370] sm:$0xff]
    %v216 = vld [vmem:[#allocation5 + $0x378] sm:$0xff]
    %v217 = vld [vmem:[#allocation5 + $0x380] sm:$0xff]
    %v218 = vld [vmem:[#allocation5 + $0x388] sm:$0xff]
    %v219 = vld [vmem:[#allocation5 + $0x390] sm:$0xff]
    %v220 = vld [vmem:[#allocation5 + $0x398] sm:$0xff]
    %v221 = vld [vmem:[#allocation5 + $0x3a0] sm:$0xff]
    %v222 = vld [vmem:[#allocation5 + $0x3a8] sm:$0xff]
    %v223 = vld [vmem:[#allocation5 + $0x3b0] sm:$0xff]
    %v224 = vld [vmem:[#allocation5 + $0x3b8] sm:$0xff]
    %v225 = vld [vmem:[#allocation5 + $0x3c0] sm:$0xff]
    %v226 = vld [vmem:[#allocation5 + $0x3c8] sm:$0xff]
    %v227 = vld [vmem:[#allocation5 + $0x3d0] sm:$0xff]
    %v228 = vld [vmem:[#allocation5 + $0x3d8] sm:$0xff]
    %v229 = vld [vmem:[#allocation5 + $0x3e0] sm:$0xff]
    %v230 = vld [vmem:[#allocation5 + $0x3e8] sm:$0xff]
    %v231 = vld [vmem:[#allocation5 + $0x3f0] sm:$0xff]
    %v232 = vld [vmem:[#allocation5 + $0x3f8] sm:$0xff]
    %v233 = vld [vmem:[#allocation5 + $0x400] sm:$0xff]
    %v234 = vld [vmem:[#allocation5 + $0x408] sm:$0xff]
    %v235 = vld [vmem:[#allocation5 + $0x410] sm:$0xff]
    %v236 = vld [vmem:[#allocation5 + $0x418] sm:$0xff]
    %v237 = vld [vmem:[#allocation5 + $0x420] sm:$0xff]
    %v238 = vld [vmem:[#allocation5 + $0x428] sm:$0xff]
    %v239 = vld [vmem:[#allocation5 + $0x430] sm:$0xff]
    %v240 = vld [vmem:[#allocation5 + $0x438] sm:$0xff]
    %v241 = vld [vmem:[#allocation5 + $0x440] sm:$0xff]
    %v242 = vld [vmem:[#allocation5 + $0x448] sm:$0xff]
    %v243 = vld [vmem:[#allocation5 + $0x450] sm:$0xff]
    %v244 = vld [vmem:[#allocation5 + $0x458] sm:$0xff]
    %v245 = vld [vmem:[#allocation5 + $0x460] sm:$0xff]
    %v246 = vld [vmem:[#allocation5 + $0x468] sm:$0xff]
    %v247 = vld [vmem:[#allocation5 + $0x470] sm:$0xff]
    %v248 = vld [vmem:[#allocation5 + $0x478] sm:$0xff]
    %v249 = vld [vmem:[#allocation5 + $0x480] sm:$0xff]
    %v250 = vld [vmem:[#allocation5 + $0x488] sm:$0xff]
    %v251 = vld [vmem:[#allocation5 + $0x490] sm:$0xff]
    %v252 = vld [vmem:[#allocation5 + $0x498] sm:$0xff]
    %v253 = vld [vmem:[#allocation5 + $0x4a0] sm:$0xff]
    %v254 = vld [vmem:[#allocation5 + $0x4a8] sm:$0xff]
    %v255 = vld [vmem:[#allocation5 + $0x4b0] sm:$0xff]
    %v256 = vld [vmem:[#allocation5 + $0x4b8] sm:$0xff]
    %v257 = vld [vmem:[#allocation5 + $0x4c0] sm:$0xff]
    %v258 = vld [vmem:[#allocation5 + $0x4c8] sm:$0xff]
    %v259 = vld [vmem:[#allocation5 + $0x4d0] sm:$0xff]
    %v260 = vld [vmem:[#allocation5 + $0x4d8] sm:$0xff]
    %v261 = vld [vmem:[#allocation5 + $0x4e0] sm:$0xff]
    %v262 = vld [vmem:[#allocation5 + $0x4e8] sm:$0xff]
    %v263 = vld [vmem:[#allocation5 + $0x4f0] sm:$0xff]
    %v264 = vld [vmem:[#allocation5 + $0x4f8] sm:$0xff]
    %v265 = vld [vmem:[#allocation5 + $0x500] sm:$0xff]
    %v266 = vld [vmem:[#allocation5 + $0x508] sm:$0xff]
    %v267 = vld [vmem:[#allocation5 + $0x510] sm:$0xff]
    %v268 = vld [vmem:[#allocation5 + $0x518] sm:$0xff]
    %v269 = vld [vmem:[#allocation5 + $0x520] sm:$0xff]
    %v270 = vld [vmem:[#allocation5 + $0x528] sm:$0xff]
    %v271 = vld [vmem:[#allocation5 + $0x530] sm:$0xff]
    %v272 = vld [vmem:[#allocation5 + $0x538] sm:$0xff]
    %v273 = vld [vmem:[#allocation5 + $0x540] sm:$0xff]
    %v274 = vld [vmem:[#allocation5 + $0x548] sm:$0xff]
    %v275 = vld [vmem:[#allocation5 + $0x550] sm:$0xff]
    %v276 = vld [vmem:[#allocation5 + $0x558] sm:$0xff]
    %v277 = vld [vmem:[#allocation5 + $0x560] sm:$0xff]
    %v278 = vld [vmem:[#allocation5 + $0x568] sm:$0xff]
    %v279 = vld [vmem:[#allocation5 + $0x570] sm:$0xff]
    %v280 = vld [vmem:[#allocation5 + $0x578] sm:$0xff]
    %v281 = vld [vmem:[#allocation5 + $0x580] sm:$0xff]
    %v282 = vld [vmem:[#allocation5 + $0x588] sm:$0xff]
    %v283 = vld [vmem:[#allocation5 + $0x590] sm:$0xff]
    %v284 = vld [vmem:[#allocation5 + $0x598] sm:$0xff]
    %v285 = vld [vmem:[#allocation5 + $0x5a0] sm:$0xff]
    %v286 = vld [vmem:[#allocation5 + $0x5a8] sm:$0xff]
    %v287 = vld [vmem:[#allocation5 + $0x5b0] sm:$0xff]
    %v288 = vld [vmem:[#allocation5 + $0x5b8] sm:$0xff]
    %v289 = vld [vmem:[#allocation5 + $0x5c0] sm:$0xff]
    %v290 = vld [vmem:[#allocation5 + $0x5c8] sm:$0xff]
    %v291 = vld [vmem:[#allocation5 + $0x5d0] sm:$0xff]
    %v292 = vld [vmem:[#allocation5 + $0x5d8] sm:$0xff]
    %v293 = vld [vmem:[#allocation5 + $0x5e0] sm:$0xff]
    %v294 = vld [vmem:[#allocation5 + $0x5e8] sm:$0xff]
    %v295 = vld [vmem:[#allocation5 + $0x5f0] sm:$0xff]
    %v296 = vld [vmem:[#allocation5 + $0x5f8] sm:$0xff]
    %v297 = vld [vmem:[#allocation5 + $0x600] sm:$0xff]
    %v298 = vld [vmem:[#allocation5 + $0x608] sm:$0xff]
    %v299 = vld [vmem:[#allocation5 + $0x610] sm:$0xff]
    %v300 = vld [vmem:[#allocation5 + $0x618] sm:$0xff]
    %v301 = vld [vmem:[#allocation5 + $0x620] sm:$0xff]
    %v302 = vld [vmem:[#allocation5 + $0x628] sm:$0xff]
    %v303 = vld [vmem:[#allocation5 + $0x630] sm:$0xff]
    %v304 = vld [vmem:[#allocation5 + $0x638] sm:$0xff]
    %v305 = vld [vmem:[#allocation5 + $0x640] sm:$0xff]
    %v306 = vld [vmem:[#allocation5 + $0x648] sm:$0xff]
    %v307 = vld [vmem:[#allocation5 + $0x650] sm:$0xff]
    %v308 = vld [vmem:[#allocation5 + $0x658] sm:$0xff]
    %v309 = vld [vmem:[#allocation5 + $0x660] sm:$0xff]
    %v310 = vld [vmem:[#allocation5 + $0x668] sm:$0xff]
    %v311 = vld [vmem:[#allocation5 + $0x670] sm:$0xff]
    %v312 = vld [vmem:[#allocation5 + $0x678] sm:$0xff]
    %v313 = vld [vmem:[#allocation5 + $0x680] sm:$0xff]
    %v314 = vld [vmem:[#allocation5 + $0x688] sm:$0xff]
    %v315 = vld [vmem:[#allocation5 + $0x690] sm:$0xff]
    %v316 = vld [vmem:[#allocation5 + $0x698] sm:$0xff]
    %v317 = vld [vmem:[#allocation5 + $0x6a0] sm:$0xff]
    %v318 = vld [vmem:[#allocation5 + $0x6a8] sm:$0xff]
    %v319 = vld [vmem:[#allocation5 + $0x6b0] sm:$0xff]
    %v320 = vld [vmem:[#allocation5 + $0x6b8] sm:$0xff]
    %v321 = vld [vmem:[#allocation5 + $0x6c0] sm:$0xff]
    %v322 = vld [vmem:[#allocation5 + $0x6c8] sm:$0xff]
    %v323 = vld [vmem:[#allocation5 + $0x6d0] sm:$0xff]
    %v324 = vld [vmem:[#allocation5 + $0x6d8] sm:$0xff]
    %v325 = vld [vmem:[#allocation5 + $0x6e0] sm:$0xff]
    %v326 = vld [vmem:[#allocation5 + $0x6e8] sm:$0xff]
    %v327 = vld [vmem:[#allocation5 + $0x6f0] sm:$0xff]
    %v328 = vld [vmem:[#allocation5 + $0x6f8] sm:$0xff]
    %v329 = vld [vmem:[#allocation5 + $0x700] sm:$0xff]
    %v330 = vld [vmem:[#allocation5 + $0x708] sm:$0xff]
    %v331 = vld [vmem:[#allocation5 + $0x710] sm:$0xff]
    %v332 = vld [vmem:[#allocation5 + $0x718] sm:$0xff]
    %v333 = vld [vmem:[#allocation5 + $0x720] sm:$0xff]
    %v334 = vld [vmem:[#allocation5 + $0x728] sm:$0xff]
    %v335 = vld [vmem:[#allocation5 + $0x730] sm:$0xff]
    %v336 = vld [vmem:[#allocation5 + $0x738] sm:$0xff]
    %v337 = vld [vmem:[#allocation5 + $0x740] sm:$0xff]
    %v338 = vld [vmem:[#allocation5 + $0x748] sm:$0xff]
    %v339 = vld [vmem:[#allocation5 + $0x750] sm:$0xff]
    %v340 = vld [vmem:[#allocation5 + $0x758] sm:$0xff]
    %v341 = vld [vmem:[#allocation5 + $0x760] sm:$0xff]
    %v342 = vld [vmem:[#allocation5 + $0x768] sm:$0xff]
    %v343 = vld [vmem:[#allocation5 + $0x770] sm:$0xff]
    %v344 = vld [vmem:[#allocation5 + $0x778] sm:$0xff]
    %v345 = vld [vmem:[#allocation5 + $0x780] sm:$0xff]
    %v346 = vld [vmem:[#allocation5 + $0x788] sm:$0xff]
    %v347 = vld [vmem:[#allocation5 + $0x790] sm:$0xff]
    %v348 = vld [vmem:[#allocation5 + $0x798] sm:$0xff]
    %v349 = vld [vmem:[#allocation5 + $0x7a0] sm:$0xff]
    %v350 = vld [vmem:[#allocation5 + $0x7a8] sm:$0xff]
    %v351 = vld [vmem:[#allocation5 + $0x7b0] sm:$0xff]
    %v352 = vld [vmem:[#allocation5 + $0x7b8] sm:$0xff]
    %v353 = vld [vmem:[#allocation5 + $0x7c0] sm:$0xff]
    %v354 = vld [vmem:[#allocation5 + $0x7c8] sm:$0xff]
    %v355 = vld [vmem:[#allocation5 + $0x7d0] sm:$0xff]
    %v356 = vld [vmem:[#allocation5 + $0x7d8] sm:$0xff]
    %v357 = vld [vmem:[#allocation5 + $0x7e0] sm:$0xff]
    %v358 = vld [vmem:[#allocation5 + $0x7e8] sm:$0xff]
    %v359 = vld [vmem:[#allocation5 + $0x7f0] sm:$0xff]
    %v360 = vld [vmem:[#allocation5 + $0x7f8] sm:$0xff]
    %v361 = vld [vmem:[#allocation7] sm:$0xf]
    %v363 = vperm.slane %v361, 0
    %v364 = vperm.slane %v361, 1
    %v365 = vperm.slane %v361, 2
    %v366 = vperm.slane %v361, 3
    %v375 = vunpack.c.l.b16 %v101
    %v376 = vunpack.c.h.b16 %v101
    %v377 = vunpack.c.l.b16 %v102
    %v378 = vunpack.c.h.b16 %v102
    %v379 = vunpack.c.l.b16 %v103
    %v380 = vunpack.c.h.b16 %v103
    %v381 = vunpack.c.l.b16 %v104
    %v382 = vunpack.c.h.b16 %v104
    %v383 = vpack.c.b16 %v375, %v375
    %v384 = vpack.c.b16 %v376, %v376
    %v385 = vpack.c.b16 %v377, %v377
    %v386 = vpack.c.b16 %v378, %v378
    %v387 = vpack.c.b16 %v379, %v379
    %v388 = vpack.c.b16 %v380, %v380
    %v389 = vpack.c.b16 %v381, %v381
    %v390 = vpack.c.b16 %v382, %v382
    %v655 = vunpack.c.l.b16 %v105
    %v656 = vunpack.c.h.b16 %v105
    %v657 = vunpack.c.l.b16 %v106
    %v658 = vunpack.c.h.b16 %v106
    %v659 = vunpack.c.l.b16 %v107
    %v660 = vunpack.c.h.b16 %v107
    %v661 = vunpack.c.l.b16 %v108
    %v662 = vunpack.c.h.b16 %v108
    %v663 = vunpack.c.l.b16 %v109
    %v664 = vunpack.c.h.b16 %v109
    %v665 = vunpack.c.l.b16 %v110
    %v666 = vunpack.c.h.b16 %v110
    %v667 = vunpack.c.l.b16 %v111
    %v668 = vunpack.c.h.b16 %v111
    %v669 = vunpack.c.l.b16 %v112
    %v670 = vunpack.c.h.b16 %v112
    %v671 = vunpack.c.l.b16 %v113
    %v672 = vunpack.c.h.b16 %v113
    %v673 = vunpack.c.l.b16 %v114
    %v674 = vunpack.c.h.b16 %v114
    %v675 = vunpack.c.l.b16 %v115
    %v676 = vunpack.c.h.b16 %v115
    %v677 = vunpack.c.l.b16 %v116
    %v678 = vunpack.c.h.b16 %v116
    %v679 = vunpack.c.l.b16 %v117
    %v680 = vunpack.c.h.b16 %v117
    %v681 = vunpack.c.l.b16 %v118
    %v682 = vunpack.c.h.b16 %v118
    %v683 = vunpack.c.l.b16 %v119
    %v684 = vunpack.c.h.b16 %v119
    %v685 = vunpack.c.l.b16 %v120
    %v686 = vunpack.c.h.b16 %v120
    %v687 = vunpack.c.l.b16 %v121
    %v688 = vunpack.c.h.b16 %v121
    %v689 = vunpack.c.l.b16 %v122
    %v690 = vunpack.c.h.b16 %v122
    %v691 = vunpack.c.l.b16 %v123
    %v692 = vunpack.c.h.b16 %v123
    %v693 = vunpack.c.l.b16 %v124
    %v694 = vunpack.c.h.b16 %v124
    %v695 = vunpack.c.l.b16 %v125
    %v696 = vunpack.c.h.b16 %v125
    %v697 = vunpack.c.l.b16 %v126
    %v698 = vunpack.c.h.b16 %v126
    %v699 = vunpack.c.l.b16 %v127
    %v700 = vunpack.c.h.b16 %v127
    %v701 = vunpack.c.l.b16 %v128
    %v702 = vunpack.c.h.b16 %v128
    %v703 = vunpack.c.l.b16 %v129
    %v704 = vunpack.c.h.b16 %v129
    %v705 = vunpack.c.l.b16 %v130
    %v706 = vunpack.c.h.b16 %v130
    %v707 = vunpack.c.l.b16 %v131
    %v708 = vunpack.c.h.b16 %v131
    %v709 = vunpack.c.l.b16 %v132
    %v710 = vunpack.c.h.b16 %v132
    %v711 = vunpack.c.l.b16 %v133
    %v712 = vunpack.c.h.b16 %v133
    %v713 = vunpack.c.l.b16 %v134
    %v714 = vunpack.c.h.b16 %v134
    %v715 = vunpack.c.l.b16 %v135
    %v716 = vunpack.c.h.b16 %v135
    %v717 = vunpack.c.l.b16 %v136
    %v718 = vunpack.c.h.b16 %v136
    %v719 = vunpack.c.l.b16 %v137
    %v720 = vunpack.c.h.b16 %v137
    %v721 = vunpack.c.l.b16 %v138
    %v722 = vunpack.c.h.b16 %v138
    %v723 = vunpack.c.l.b16 %v139
    %v724 = vunpack.c.h.b16 %v139
    %v725 = vunpack.c.l.b16 %v140
    %v726 = vunpack.c.h.b16 %v140
    %v727 = vunpack.c.l.b16 %v141
    %v728 = vunpack.c.h.b16 %v141
    %v729 = vunpack.c.l.b16 %v142
    %v730 = vunpack.c.h.b16 %v142
    %v731 = vunpack.c.l.b16 %v143
    %v732 = vunpack.c.h.b16 %v143
    %v733 = vunpack.c.l.b16 %v144
    %v734 = vunpack.c.h.b16 %v144
    %v735 = vunpack.c.l.b16 %v145
    %v736 = vunpack.c.h.b16 %v145
    %v737 = vunpack.c.l.b16 %v146
    %v738 = vunpack.c.h.b16 %v146
    %v739 = vunpack.c.l.b16 %v147
    %v740 = vunpack.c.h.b16 %v147
    %v741 = vunpack.c.l.b16 %v148
    %v742 = vunpack.c.h.b16 %v148
    %v743 = vunpack.c.l.b16 %v149
    %v744 = vunpack.c.h.b16 %v149
    %v745 = vunpack.c.l.b16 %v150
    %v746 = vunpack.c.h.b16 %v150
    %v747 = vunpack.c.l.b16 %v151
    %v748 = vunpack.c.h.b16 %v151
    %v749 = vunpack.c.l.b16 %v152
    %v750 = vunpack.c.h.b16 %v152
    %v751 = vunpack.c.l.b16 %v153
    %v752 = vunpack.c.h.b16 %v153
    %v753 = vunpack.c.l.b16 %v154
    %v754 = vunpack.c.h.b16 %v154
    %v755 = vunpack.c.l.b16 %v155
    %v756 = vunpack.c.h.b16 %v155
    %v757 = vunpack.c.l.b16 %v156
    %v758 = vunpack.c.h.b16 %v156
    %v759 = vunpack.c.l.b16 %v157
    %v760 = vunpack.c.h.b16 %v157
    %v761 = vunpack.c.l.b16 %v158
    %v762 = vunpack.c.h.b16 %v158
    %v763 = vunpack.c.l.b16 %v159
    %v764 = vunpack.c.h.b16 %v159
    %v765 = vunpack.c.l.b16 %v160
    %v766 = vunpack.c.h.b16 %v160
    %v767 = vunpack.c.l.b16 %v161
    %v768 = vunpack.c.h.b16 %v161
    %v769 = vunpack.c.l.b16 %v162
    %v770 = vunpack.c.h.b16 %v162
    %v771 = vunpack.c.l.b16 %v163
    %v772 = vunpack.c.h.b16 %v163
    %v773 = vunpack.c.l.b16 %v164
    %v774 = vunpack.c.h.b16 %v164
    %v775 = vunpack.c.l.b16 %v165
    %v776 = vunpack.c.h.b16 %v165
    %v777 = vunpack.c.l.b16 %v166
    %v778 = vunpack.c.h.b16 %v166
    %v779 = vunpack.c.l.b16 %v167
    %v780 = vunpack.c.h.b16 %v167
    %v781 = vunpack.c.l.b16 %v168
    %v782 = vunpack.c.h.b16 %v168
    %v783 = vunpack.c.l.b16 %v169
    %v784 = vunpack.c.h.b16 %v169
    %v785 = vunpack.c.l.b16 %v170
    %v786 = vunpack.c.h.b16 %v170
    %v787 = vunpack.c.l.b16 %v171
    %v788 = vunpack.c.h.b16 %v171
    %v789 = vunpack.c.l.b16 %v172
    %v790 = vunpack.c.h.b16 %v172
    %v791 = vunpack.c.l.b16 %v173
    %v792 = vunpack.c.h.b16 %v173
    %v793 = vunpack.c.l.b16 %v174
    %v794 = vunpack.c.h.b16 %v174
    %v795 = vunpack.c.l.b16 %v175
    %v796 = vunpack.c.h.b16 %v175
    %v797 = vunpack.c.l.b16 %v176
    %v798 = vunpack.c.h.b16 %v176
    %v799 = vunpack.c.l.b16 %v177
    %v800 = vunpack.c.h.b16 %v177
    %v801 = vunpack.c.l.b16 %v178
    %v802 = vunpack.c.h.b16 %v178
    %v803 = vunpack.c.l.b16 %v179
    %v804 = vunpack.c.h.b16 %v179
    %v805 = vunpack.c.l.b16 %v180
    %v806 = vunpack.c.h.b16 %v180
    %v807 = vunpack.c.l.b16 %v181
    %v808 = vunpack.c.h.b16 %v181
    %v809 = vunpack.c.l.b16 %v182
    %v810 = vunpack.c.h.b16 %v182
    %v811 = vunpack.c.l.b16 %v183
    %v812 = vunpack.c.h.b16 %v183
    %v813 = vunpack.c.l.b16 %v184
    %v814 = vunpack.c.h.b16 %v184
    %v815 = vunpack.c.l.b16 %v185
    %v816 = vunpack.c.h.b16 %v185
    %v817 = vunpack.c.l.b16 %v186
    %v818 = vunpack.c.h.b16 %v186
    %v819 = vunpack.c.l.b16 %v187
    %v820 = vunpack.c.h.b16 %v187
    %v821 = vunpack.c.l.b16 %v188
    %v822 = vunpack.c.h.b16 %v188
    %v823 = vunpack.c.l.b16 %v189
    %v824 = vunpack.c.h.b16 %v189
    %v825 = vunpack.c.l.b16 %v190
    %v826 = vunpack.c.h.b16 %v190
    %v827 = vunpack.c.l.b16 %v191
    %v828 = vunpack.c.h.b16 %v191
    %v829 = vunpack.c.l.b16 %v192
    %v830 = vunpack.c.h.b16 %v192
    %v831 = vunpack.c.l.b16 %v193
    %v832 = vunpack.c.h.b16 %v193
    %v833 = vunpack.c.l.b16 %v194
    %v834 = vunpack.c.h.b16 %v194
    %v835 = vunpack.c.l.b16 %v195
    %v836 = vunpack.c.h.b16 %v195
    %v837 = vunpack.c.l.b16 %v196
    %v838 = vunpack.c.h.b16 %v196
    %v839 = vunpack.c.l.b16 %v197
    %v840 = vunpack.c.h.b16 %v197
    %v841 = vunpack.c.l.b16 %v198
    %v842 = vunpack.c.h.b16 %v198
    %v843 = vunpack.c.l.b16 %v199
    %v844 = vunpack.c.h.b16 %v199
    %v845 = vunpack.c.l.b16 %v200
    %v846 = vunpack.c.h.b16 %v200
    %v847 = vunpack.c.l.b16 %v201
    %v848 = vunpack.c.h.b16 %v201
    %v849 = vunpack.c.l.b16 %v202
    %v850 = vunpack.c.h.b16 %v202
    %v851 = vunpack.c.l.b16 %v203
    %v852 = vunpack.c.h.b16 %v203
    %v853 = vunpack.c.l.b16 %v204
    %v854 = vunpack.c.h.b16 %v204
    %v855 = vunpack.c.l.b16 %v205
    %v856 = vunpack.c.h.b16 %v205
    %v857 = vunpack.c.l.b16 %v206
    %v858 = vunpack.c.h.b16 %v206
    %v859 = vunpack.c.l.b16 %v207
    %v860 = vunpack.c.h.b16 %v207
    %v861 = vunpack.c.l.b16 %v208
    %v862 = vunpack.c.h.b16 %v208
    %v863 = vunpack.c.l.b16 %v209
    %v864 = vunpack.c.h.b16 %v209
    %v865 = vunpack.c.l.b16 %v210
    %v866 = vunpack.c.h.b16 %v210
    %v867 = vunpack.c.l.b16 %v211
    %v868 = vunpack.c.h.b16 %v211
    %v869 = vunpack.c.l.b16 %v212
    %v870 = vunpack.c.h.b16 %v212
    %v871 = vunpack.c.l.b16 %v213
    %v872 = vunpack.c.h.b16 %v213
    %v873 = vunpack.c.l.b16 %v214
    %v874 = vunpack.c.h.b16 %v214
    %v875 = vunpack.c.l.b16 %v215
    %v876 = vunpack.c.h.b16 %v215
    %v877 = vunpack.c.l.b16 %v216
    %v878 = vunpack.c.h.b16 %v216
    %v879 = vunpack.c.l.b16 %v217
    %v880 = vunpack.c.h.b16 %v217
    %v881 = vunpack.c.l.b16 %v218
    %v882 = vunpack.c.h.b16 %v218
    %v883 = vunpack.c.l.b16 %v219
    %v884 = vunpack.c.h.b16 %v219
    %v885 = vunpack.c.l.b16 %v220
    %v886 = vunpack.c.h.b16 %v220
    %v887 = vunpack.c.l.b16 %v221
    %v888 = vunpack.c.h.b16 %v221
    %v889 = vunpack.c.l.b16 %v222
    %v890 = vunpack.c.h.b16 %v222
    %v891 = vunpack.c.l.b16 %v223
    %v892 = vunpack.c.h.b16 %v223
    %v893 = vunpack.c.l.b16 %v224
    %v894 = vunpack.c.h.b16 %v224
    %v895 = vunpack.c.l.b16 %v225
    %v896 = vunpack.c.h.b16 %v225
    %v897 = vunpack.c.l.b16 %v226
    %v898 = vunpack.c.h.b16 %v226
    %v899 = vunpack.c.l.b16 %v227
    %v900 = vunpack.c.h.b16 %v227
    %v901 = vunpack.c.l.b16 %v228
    %v902 = vunpack.c.h.b16 %v228
    %v903 = vunpack.c.l.b16 %v229
    %v904 = vunpack.c.h.b16 %v229
    %v905 = vunpack.c.l.b16 %v230
    %v906 = vunpack.c.h.b16 %v230
    %v907 = vunpack.c.l.b16 %v231
    %v908 = vunpack.c.h.b16 %v231
    %v909 = vunpack.c.l.b16 %v232
    %v910 = vunpack.c.h.b16 %v232
    %v911 = vunpack.c.l.b16 %v233
    %v912 = vunpack.c.h.b16 %v233
    %v913 = vunpack.c.l.b16 %v234
    %v914 = vunpack.c.h.b16 %v234
    %v915 = vunpack.c.l.b16 %v235
    %v916 = vunpack.c.h.b16 %v235
    %v917 = vunpack.c.l.b16 %v236
    %v918 = vunpack.c.h.b16 %v236
    %v919 = vunpack.c.l.b16 %v237
    %v920 = vunpack.c.h.b16 %v237
    %v921 = vunpack.c.l.b16 %v238
    %v922 = vunpack.c.h.b16 %v238
    %v923 = vunpack.c.l.b16 %v239
    %v924 = vunpack.c.h.b16 %v239
    %v925 = vunpack.c.l.b16 %v240
    %v926 = vunpack.c.h.b16 %v240
    %v927 = vunpack.c.l.b16 %v241
    %v928 = vunpack.c.h.b16 %v241
    %v929 = vunpack.c.l.b16 %v242
    %v930 = vunpack.c.h.b16 %v242
    %v931 = vunpack.c.l.b16 %v243
    %v932 = vunpack.c.h.b16 %v243
    %v933 = vunpack.c.l.b16 %v244
    %v934 = vunpack.c.h.b16 %v244
    %v935 = vunpack.c.l.b16 %v245
    %v936 = vunpack.c.h.b16 %v245
    %v937 = vunpack.c.l.b16 %v246
    %v938 = vunpack.c.h.b16 %v246
    %v939 = vunpack.c.l.b16 %v247
    %v940 = vunpack.c.h.b16 %v247
    %v941 = vunpack.c.l.b16 %v248
    %v942 = vunpack.c.h.b16 %v248
    %v943 = vunpack.c.l.b16 %v249
    %v944 = vunpack.c.h.b16 %v249
    %v945 = vunpack.c.l.b16 %v250
    %v946 = vunpack.c.h.b16 %v250
    %v947 = vunpack.c.l.b16 %v251
    %v948 = vunpack.c.h.b16 %v251
    %v949 = vunpack.c.l.b16 %v252
    %v950 = vunpack.c.h.b16 %v252
    %v951 = vunpack.c.l.b16 %v253
    %v952 = vunpack.c.h.b16 %v253
    %v953 = vunpack.c.l.b16 %v254
    %v954 = vunpack.c.h.b16 %v254
    %v955 = vunpack.c.l.b16 %v255
    %v956 = vunpack.c.h.b16 %v255
    %v957 = vunpack.c.l.b16 %v256
    %v958 = vunpack.c.h.b16 %v256
    %v959 = vunpack.c.l.b16 %v257
    %v960 = vunpack.c.h.b16 %v257
    %v961 = vunpack.c.l.b16 %v258
    %v962 = vunpack.c.h.b16 %v258
    %v963 = vunpack.c.l.b16 %v259
    %v964 = vunpack.c.h.b16 %v259
    %v965 = vunpack.c.l.b16 %v260
    %v966 = vunpack.c.h.b16 %v260
    %v967 = vunpack.c.l.b16 %v261
    %v968 = vunpack.c.h.b16 %v261
    %v969 = vunpack.c.l.b16 %v262
    %v970 = vunpack.c.h.b16 %v262
    %v971 = vunpack.c.l.b16 %v263
    %v972 = vunpack.c.h.b16 %v263
    %v973 = vunpack.c.l.b16 %v264
    %v974 = vunpack.c.h.b16 %v264
    %v975 = vunpack.c.l.b16 %v265
    %v976 = vunpack.c.h.b16 %v265
    %v977 = vunpack.c.l.b16 %v266
    %v978 = vunpack.c.h.b16 %v266
    %v979 = vunpack.c.l.b16 %v267
    %v980 = vunpack.c.h.b16 %v267
    %v981 = vunpack.c.l.b16 %v268
    %v982 = vunpack.c.h.b16 %v268
    %v983 = vunpack.c.l.b16 %v269
    %v984 = vunpack.c.h.b16 %v269
    %v985 = vunpack.c.l.b16 %v270
    %v986 = vunpack.c.h.b16 %v270
    %v987 = vunpack.c.l.b16 %v271
    %v988 = vunpack.c.h.b16 %v271
    %v989 = vunpack.c.l.b16 %v272
    %v990 = vunpack.c.h.b16 %v272
    %v991 = vunpack.c.l.b16 %v273
    %v992 = vunpack.c.h.b16 %v273
    %v993 = vunpack.c.l.b16 %v274
    %v994 = vunpack.c.h.b16 %v274
    %v995 = vunpack.c.l.b16 %v275
    %v996 = vunpack.c.h.b16 %v275
    %v997 = vunpack.c.l.b16 %v276
    %v998 = vunpack.c.h.b16 %v276
    %v999 = vunpack.c.l.b16 %v277
    %v1000 = vunpack.c.h.b16 %v277
    %v1001 = vunpack.c.l.b16 %v278
    %v1002 = vunpack.c.h.b16 %v278
    %v1003 = vunpack.c.l.b16 %v279
    %v1004 = vunpack.c.h.b16 %v279
    %v1005 = vunpack.c.l.b16 %v280
    %v1006 = vunpack.c.h.b16 %v280
    %v1007 = vunpack.c.l.b16 %v281
    %v1008 = vunpack.c.h.b16 %v281
    %v1009 = vunpack.c.l.b16 %v282
    %v1010 = vunpack.c.h.b16 %v282
    %v1011 = vunpack.c.l.b16 %v283
    %v1012 = vunpack.c.h.b16 %v283
    %v1013 = vunpack.c.l.b16 %v284
    %v1014 = vunpack.c.h.b16 %v284
    %v1015 = vunpack.c.l.b16 %v285
    %v1016 = vunpack.c.h.b16 %v285
    %v1017 = vunpack.c.l.b16 %v286
    %v1018 = vunpack.c.h.b16 %v286
    %v1019 = vunpack.c.l.b16 %v287
    %v1020 = vunpack.c.h.b16 %v287
    %v1021 = vunpack.c.l.b16 %v288
    %v1022 = vunpack.c.h.b16 %v288
    %v1023 = vunpack.c.l.b16 %v289
    %v1024 = vunpack.c.h.b16 %v289
    %v1025 = vunpack.c.l.b16 %v290
    %v1026 = vunpack.c.h.b16 %v290
    %v1027 = vunpack.c.l.b16 %v291
    %v1028 = vunpack.c.h.b16 %v291
    %v1029 = vunpack.c.l.b16 %v292
    %v1030 = vunpack.c.h.b16 %v292
    %v1031 = vunpack.c.l.b16 %v293
    %v1032 = vunpack.c.h.b16 %v293
    %v1033 = vunpack.c.l.b16 %v294
    %v1034 = vunpack.c.h.b16 %v294
    %v1035 = vunpack.c.l.b16 %v295
    %v1036 = vunpack.c.h.b16 %v295
    %v1037 = vunpack.c.l.b16 %v296
    %v1038 = vunpack.c.h.b16 %v296
    %v1039 = vunpack.c.l.b16 %v297
    %v1040 = vunpack.c.h.b16 %v297
    %v1041 = vunpack.c.l.b16 %v298
    %v1042 = vunpack.c.h.b16 %v298
    %v1043 = vunpack.c.l.b16 %v299
    %v1044 = vunpack.c.h.b16 %v299
    %v1045 = vunpack.c.l.b16 %v300
    %v1046 = vunpack.c.h.b16 %v300
    %v1047 = vunpack.c.l.b16 %v301
    %v1048 = vunpack.c.h.b16 %v301
    %v1049 = vunpack.c.l.b16 %v302
    %v1050 = vunpack.c.h.b16 %v302
    %v1051 = vunpack.c.l.b16 %v303
    %v1052 = vunpack.c.h.b16 %v303
    %v1053 = vunpack.c.l.b16 %v304
    %v1054 = vunpack.c.h.b16 %v304
    %v1055 = vunpack.c.l.b16 %v305
    %v1056 = vunpack.c.h.b16 %v305
    %v1057 = vunpack.c.l.b16 %v306
    %v1058 = vunpack.c.h.b16 %v306
    %v1059 = vunpack.c.l.b16 %v307
    %v1060 = vunpack.c.h.b16 %v307
    %v1061 = vunpack.c.l.b16 %v308
    %v1062 = vunpack.c.h.b16 %v308
    %v1063 = vunpack.c.l.b16 %v309
    %v1064 = vunpack.c.h.b16 %v309
    %v1065 = vunpack.c.l.b16 %v310
    %v1066 = vunpack.c.h.b16 %v310
    %v1067 = vunpack.c.l.b16 %v311
    %v1068 = vunpack.c.h.b16 %v311
    %v1069 = vunpack.c.l.b16 %v312
    %v1070 = vunpack.c.h.b16 %v312
    %v1071 = vunpack.c.l.b16 %v313
    %v1072 = vunpack.c.h.b16 %v313
    %v1073 = vunpack.c.l.b16 %v314
    %v1074 = vunpack.c.h.b16 %v314
    %v1075 = vunpack.c.l.b16 %v315
    %v1076 = vunpack.c.h.b16 %v315
    %v1077 = vunpack.c.l.b16 %v316
    %v1078 = vunpack.c.h.b16 %v316
    %v1079 = vunpack.c.l.b16 %v317
    %v1080 = vunpack.c.h.b16 %v317
    %v1081 = vunpack.c.l.b16 %v318
    %v1082 = vunpack.c.h.b16 %v318
    %v1083 = vunpack.c.l.b16 %v319
    %v1084 = vunpack.c.h.b16 %v319
    %v1085 = vunpack.c.l.b16 %v320
    %v1086 = vunpack.c.h.b16 %v320
    %v1087 = vunpack.c.l.b16 %v321
    %v1088 = vunpack.c.h.b16 %v321
    %v1089 = vunpack.c.l.b16 %v322
    %v1090 = vunpack.c.h.b16 %v322
    %v1091 = vunpack.c.l.b16 %v323
    %v1092 = vunpack.c.h.b16 %v323
    %v1093 = vunpack.c.l.b16 %v324
    %v1094 = vunpack.c.h.b16 %v324
    %v1095 = vunpack.c.l.b16 %v325
    %v1096 = vunpack.c.h.b16 %v325
    %v1097 = vunpack.c.l.b16 %v326
    %v1098 = vunpack.c.h.b16 %v326
    %v1099 = vunpack.c.l.b16 %v327
    %v1100 = vunpack.c.h.b16 %v327
    %v1101 = vunpack.c.l.b16 %v328
    %v1102 = vunpack.c.h.b16 %v328
    %v1103 = vunpack.c.l.b16 %v329
    %v1104 = vunpack.c.h.b16 %v329
    %v1105 = vunpack.c.l.b16 %v330
    %v1106 = vunpack.c.h.b16 %v330
    %v1107 = vunpack.c.l.b16 %v331
    %v1108 = vunpack.c.h.b16 %v331
    %v1109 = vunpack.c.l.b16 %v332
    %v1110 = vunpack.c.h.b16 %v332
    %v1111 = vunpack.c.l.b16 %v333
    %v1112 = vunpack.c.h.b16 %v333
    %v1113 = vunpack.c.l.b16 %v334
    %v1114 = vunpack.c.h.b16 %v334
    %v1115 = vunpack.c.l.b16 %v335
    %v1116 = vunpack.c.h.b16 %v335
    %v1117 = vunpack.c.l.b16 %v336
    %v1118 = vunpack.c.h.b16 %v336
    %v1119 = vunpack.c.l.b16 %v337
    %v1120 = vunpack.c.h.b16 %v337
    %v1121 = vunpack.c.l.b16 %v338
    %v1122 = vunpack.c.h.b16 %v338
    %v1123 = vunpack.c.l.b16 %v339
    %v1124 = vunpack.c.h.b16 %v339
    %v1125 = vunpack.c.l.b16 %v340
    %v1126 = vunpack.c.h.b16 %v340
    %v1127 = vunpack.c.l.b16 %v341
    %v1128 = vunpack.c.h.b16 %v341
    %v1129 = vunpack.c.l.b16 %v342
    %v1130 = vunpack.c.h.b16 %v342
    %v1131 = vunpack.c.l.b16 %v343
    %v1132 = vunpack.c.h.b16 %v343
    %v1133 = vunpack.c.l.b16 %v344
    %v1134 = vunpack.c.h.b16 %v344
    %v1135 = vunpack.c.l.b16 %v345
    %v1136 = vunpack.c.h.b16 %v345
    %v1137 = vunpack.c.l.b16 %v346
    %v1138 = vunpack.c.h.b16 %v346
    %v1139 = vunpack.c.l.b16 %v347
    %v1140 = vunpack.c.h.b16 %v347
    %v1141 = vunpack.c.l.b16 %v348
    %v1142 = vunpack.c.h.b16 %v348
    %v1143 = vunpack.c.l.b16 %v349
    %v1144 = vunpack.c.h.b16 %v349
    %v1145 = vunpack.c.l.b16 %v350
    %v1146 = vunpack.c.h.b16 %v350
    %v1147 = vunpack.c.l.b16 %v351
    %v1148 = vunpack.c.h.b16 %v351
    %v1149 = vunpack.c.l.b16 %v352
    %v1150 = vunpack.c.h.b16 %v352
    %v1151 = vunpack.c.l.b16 %v353
    %v1152 = vunpack.c.h.b16 %v353
    %v1153 = vunpack.c.l.b16 %v354
    %v1154 = vunpack.c.h.b16 %v354
    %v1155 = vunpack.c.l.b16 %v355
    %v1156 = vunpack.c.h.b16 %v355
    %v1157 = vunpack.c.l.b16 %v356
    %v1158 = vunpack.c.h.b16 %v356
    %v1159 = vunpack.c.l.b16 %v357
    %v1160 = vunpack.c.h.b16 %v357
    %v1161 = vunpack.c.l.b16 %v358
    %v1162 = vunpack.c.h.b16 %v358
    %v1163 = vunpack.c.l.b16 %v359
    %v1164 = vunpack.c.h.b16 %v359
    %v1165 = vunpack.c.l.b16 %v360
    %v1166 = vunpack.c.h.b16 %v360
    %v1167 = vpack.c.b16 %v659, %v655
    %v1168 = vpack.c.b16 %v660, %v656
    %v1169 = vpack.c.b16 %v661, %v657
    %v1170 = vpack.c.b16 %v662, %v658
    %v1171 = vpack.c.b16 %v667, %v663
    %v1172 = vpack.c.b16 %v668, %v664
    %v1173 = vpack.c.b16 %v669, %v665
    %v1174 = vpack.c.b16 %v670, %v666
    %v1175 = vpack.c.b16 %v675, %v671
    %v1176 = vpack.c.b16 %v676, %v672
    %v1177 = vpack.c.b16 %v677, %v673
    %v1178 = vpack.c.b16 %v678, %v674
    %v1179 = vpack.c.b16 %v683, %v679
    %v1180 = vpack.c.b16 %v684, %v680
    %v1181 = vpack.c.b16 %v685, %v681
    %v1182 = vpack.c.b16 %v686, %v682
    %v1183 = vpack.c.b16 %v691, %v687
    %v1184 = vpack.c.b16 %v692, %v688
    %v1185 = vpack.c.b16 %v693, %v689
    %v1186 = vpack.c.b16 %v694, %v690
    %v1187 = vpack.c.b16 %v699, %v695
    %v1188 = vpack.c.b16 %v700, %v696
    %v1189 = vpack.c.b16 %v701, %v697
    %v1190 = vpack.c.b16 %v702, %v698
    %v1191 = vpack.c.b16 %v707, %v703
    %v1192 = vpack.c.b16 %v708, %v704
    %v1193 = vpack.c.b16 %v709, %v705
    %v1194 = vpack.c.b16 %v710, %v706
    %v1195 = vpack.c.b16 %v715, %v711
    %v1196 = vpack.c.b16 %v716, %v712
    %v1197 = vpack.c.b16 %v717, %v713
    %v1198 = vpack.c.b16 %v718, %v714
    %v1199 = vpack.c.b16 %v723, %v719
    %v1200 = vpack.c.b16 %v724, %v720
    %v1201 = vpack.c.b16 %v725, %v721
    %v1202 = vpack.c.b16 %v726, %v722
    %v1203 = vpack.c.b16 %v731, %v727
    %v1204 = vpack.c.b16 %v732, %v728
    %v1205 = vpack.c.b16 %v733, %v729
    %v1206 = vpack.c.b16 %v734, %v730
    %v1207 = vpack.c.b16 %v739, %v735
    %v1208 = vpack.c.b16 %v740, %v736
    %v1209 = vpack.c.b16 %v741, %v737
    %v1210 = vpack.c.b16 %v742, %v738
    %v1211 = vpack.c.b16 %v747, %v743
    %v1212 = vpack.c.b16 %v748, %v744
    %v1213 = vpack.c.b16 %v749, %v745
    %v1214 = vpack.c.b16 %v750, %v746
    %v1215 = vpack.c.b16 %v755, %v751
    %v1216 = vpack.c.b16 %v756, %v752
    %v1217 = vpack.c.b16 %v757, %v753
    %v1218 = vpack.c.b16 %v758, %v754
    %v1219 = vpack.c.b16 %v763, %v759
    %v1220 = vpack.c.b16 %v764, %v760
    %v1221 = vpack.c.b16 %v765, %v761
    %v1222 = vpack.c.b16 %v766, %v762
    %v1223 = vpack.c.b16 %v771, %v767
    %v1224 = vpack.c.b16 %v772, %v768
    %v1225 = vpack.c.b16 %v773, %v769
    %v1226 = vpack.c.b16 %v774, %v770
    %v1227 = vpack.c.b16 %v779, %v775
    %v1228 = vpack.c.b16 %v780, %v776
    %v1229 = vpack.c.b16 %v781, %v777
    %v1230 = vpack.c.b16 %v782, %v778
    %v1231 = vpack.c.b16 %v787, %v783
    %v1232 = vpack.c.b16 %v788, %v784
    %v1233 = vpack.c.b16 %v789, %v785
    %v1234 = vpack.c.b16 %v790, %v786
    %v1235 = vpack.c.b16 %v795, %v791
    %v1236 = vpack.c.b16 %v796, %v792
    %v1237 = vpack.c.b16 %v797, %v793
    %v1238 = vpack.c.b16 %v798, %v794
    %v1239 = vpack.c.b16 %v803, %v799
    %v1240 = vpack.c.b16 %v804, %v800
    %v1241 = vpack.c.b16 %v805, %v801
    %v1242 = vpack.c.b16 %v806, %v802
    %v1243 = vpack.c.b16 %v811, %v807
    %v1244 = vpack.c.b16 %v812, %v808
    %v1245 = vpack.c.b16 %v813, %v809
    %v1246 = vpack.c.b16 %v814, %v810
    %v1247 = vpack.c.b16 %v819, %v815
    %v1248 = vpack.c.b16 %v820, %v816
    %v1249 = vpack.c.b16 %v821, %v817
    %v1250 = vpack.c.b16 %v822, %v818
    %v1251 = vpack.c.b16 %v827, %v823
    %v1252 = vpack.c.b16 %v828, %v824
    %v1253 = vpack.c.b16 %v829, %v825
    %v1254 = vpack.c.b16 %v830, %v826
    %v1255 = vpack.c.b16 %v835, %v831
    %v1256 = vpack.c.b16 %v836, %v832
    %v1257 = vpack.c.b16 %v837, %v833
    %v1258 = vpack.c.b16 %v838, %v834
    %v1259 = vpack.c.b16 %v843, %v839
    %v1260 = vpack.c.b16 %v844, %v840
    %v1261 = vpack.c.b16 %v845, %v841
    %v1262 = vpack.c.b16 %v846, %v842
    %v1263 = vpack.c.b16 %v851, %v847
    %v1264 = vpack.c.b16 %v852, %v848
    %v1265 = vpack.c.b16 %v853, %v849
    %v1266 = vpack.c.b16 %v854, %v850
    %v1267 = vpack.c.b16 %v859, %v855
    %v1268 = vpack.c.b16 %v860, %v856
    %v1269 = vpack.c.b16 %v861, %v857
    %v1270 = vpack.c.b16 %v862, %v858
    %v1271 = vpack.c.b16 %v867, %v863
    %v1272 = vpack.c.b16 %v868, %v864
    %v1273 = vpack.c.b16 %v869, %v865
    %v1274 = vpack.c.b16 %v870, %v866
    %v1275 = vpack.c.b16 %v875, %v871
    %v1276 = vpack.c.b16 %v876, %v872
    %v1277 = vpack.c.b16 %v877, %v873
    %v1278 = vpack.c.b16 %v878, %v874
    %v1279 = vpack.c.b16 %v883, %v879
    %v1280 = vpack.c.b16 %v884, %v880
    %v1281 = vpack.c.b16 %v885, %v881
    %v1282 = vpack.c.b16 %v886, %v882
    %v1283 = vpack.c.b16 %v891, %v887
    %v1284 = vpack.c.b16 %v892, %v888
    %v1285 = vpack.c.b16 %v893, %v889
    %v1286 = vpack.c.b16 %v894, %v890
    %v1287 = vpack.c.b16 %v899, %v895
    %v1288 = vpack.c.b16 %v900, %v896
    %v1289 = vpack.c.b16 %v901, %v897
    %v1290 = vpack.c.b16 %v902, %v898
    %v1291 = vpack.c.b16 %v907, %v903
    %v1292 = vpack.c.b16 %v908, %v904
    %v1293 = vpack.c.b16 %v909, %v905
    %v1294 = vpack.c.b16 %v910, %v906
    %v1295 = vpack.c.b16 %v915, %v911
    %v1296 = vpack.c.b16 %v916, %v912
    %v1297 = vpack.c.b16 %v917, %v913
    %v1298 = vpack.c.b16 %v918, %v914
    %v1299 = vpack.c.b16 %v923, %v919
    %v1300 = vpack.c.b16 %v924, %v920
    %v1301 = vpack.c.b16 %v925, %v921
    %v1302 = vpack.c.b16 %v926, %v922
    %v1303 = vpack.c.b16 %v931, %v927
    %v1304 = vpack.c.b16 %v932, %v928
    %v1305 = vpack.c.b16 %v933, %v929
    %v1306 = vpack.c.b16 %v934, %v930
    %v1307 = vpack.c.b16 %v939, %v935
    %v1308 = vpack.c.b16 %v940, %v936
    %v1309 = vpack.c.b16 %v941, %v937
    %v1310 = vpack.c.b16 %v942, %v938
    %v1311 = vpack.c.b16 %v947, %v943
    %v1312 = vpack.c.b16 %v948, %v944
    %v1313 = vpack.c.b16 %v949, %v945
    %v1314 = vpack.c.b16 %v950, %v946
    %v1315 = vpack.c.b16 %v955, %v951
    %v1316 = vpack.c.b16 %v956, %v952
    %v1317 = vpack.c.b16 %v957, %v953
    %v1318 = vpack.c.b16 %v958, %v954
    %v1319 = vpack.c.b16 %v963, %v959
    %v1320 = vpack.c.b16 %v964, %v960
    %v1321 = vpack.c.b16 %v965, %v961
    %v1322 = vpack.c.b16 %v966, %v962
    %v1323 = vpack.c.b16 %v971, %v967
    %v1324 = vpack.c.b16 %v972, %v968
    %v1325 = vpack.c.b16 %v973, %v969
    %v1326 = vpack.c.b16 %v974, %v970
    %v1327 = vpack.c.b16 %v979, %v975
    %v1328 = vpack.c.b16 %v980, %v976
    %v1329 = vpack.c.b16 %v981, %v977
    %v1330 = vpack.c.b16 %v982, %v978
    %v1331 = vpack.c.b16 %v987, %v983
    %v1332 = vpack.c.b16 %v988, %v984
    %v1333 = vpack.c.b16 %v989, %v985
    %v1334 = vpack.c.b16 %v990, %v986
    %v1335 = vpack.c.b16 %v995, %v991
    %v1336 = vpack.c.b16 %v996, %v992
    %v1337 = vpack.c.b16 %v997, %v993
    %v1338 = vpack.c.b16 %v998, %v994
    %v1339 = vpack.c.b16 %v1003, %v999
    %v1340 = vpack.c.b16 %v1004, %v1000
    %v1341 = vpack.c.b16 %v1005, %v1001
    %v1342 = vpack.c.b16 %v1006, %v1002
    %v1343 = vpack.c.b16 %v1011, %v1007
    %v1344 = vpack.c.b16 %v1012, %v1008
    %v1345 = vpack.c.b16 %v1013, %v1009
    %v1346 = vpack.c.b16 %v1014, %v1010
    %v1347 = vpack.c.b16 %v1019, %v1015
    %v1348 = vpack.c.b16 %v1020, %v1016
    %v1349 = vpack.c.b16 %v1021, %v1017
    %v1350 = vpack.c.b16 %v1022, %v1018
    %v1351 = vpack.c.b16 %v1027, %v1023
    %v1352 = vpack.c.b16 %v1028, %v1024
    %v1353 = vpack.c.b16 %v1029, %v1025
    %v1354 = vpack.c.b16 %v1030, %v1026
    %v1355 = vpack.c.b16 %v1035, %v1031
    %v1356 = vpack.c.b16 %v1036, %v1032
    %v1357 = vpack.c.b16 %v1037, %v1033
    %v1358 = vpack.c.b16 %v1038, %v1034
    %v1359 = vpack.c.b16 %v1043, %v1039
    %v1360 = vpack.c.b16 %v1044, %v1040
    %v1361 = vpack.c.b16 %v1045, %v1041
    %v1362 = vpack.c.b16 %v1046, %v1042
    %v1363 = vpack.c.b16 %v1051, %v1047
    %v1364 = vpack.c.b16 %v1052, %v1048
    %v1365 = vpack.c.b16 %v1053, %v1049
    %v1366 = vpack.c.b16 %v1054, %v1050
    %v1367 = vpack.c.b16 %v1059, %v1055
    %v1368 = vpack.c.b16 %v1060, %v1056
    %v1369 = vpack.c.b16 %v1061, %v1057
    %v1370 = vpack.c.b16 %v1062, %v1058
    %v1371 = vpack.c.b16 %v1067, %v1063
    %v1372 = vpack.c.b16 %v1068, %v1064
    %v1373 = vpack.c.b16 %v1069, %v1065
    %v1374 = vpack.c.b16 %v1070, %v1066
    %v1375 = vpack.c.b16 %v1075, %v1071
    %v1376 = vpack.c.b16 %v1076, %v1072
    %v1377 = vpack.c.b16 %v1077, %v1073
    %v1378 = vpack.c.b16 %v1078, %v1074
    %v1379 = vpack.c.b16 %v1083, %v1079
    %v1380 = vpack.c.b16 %v1084, %v1080
    %v1381 = vpack.c.b16 %v1085, %v1081
    %v1382 = vpack.c.b16 %v1086, %v1082
    %v1383 = vpack.c.b16 %v1091, %v1087
    %v1384 = vpack.c.b16 %v1092, %v1088
    %v1385 = vpack.c.b16 %v1093, %v1089
    %v1386 = vpack.c.b16 %v1094, %v1090
    %v1387 = vpack.c.b16 %v1099, %v1095
    %v1388 = vpack.c.b16 %v1100, %v1096
    %v1389 = vpack.c.b16 %v1101, %v1097
    %v1390 = vpack.c.b16 %v1102, %v1098
    %v1391 = vpack.c.b16 %v1107, %v1103
    %v1392 = vpack.c.b16 %v1108, %v1104
    %v1393 = vpack.c.b16 %v1109, %v1105
    %v1394 = vpack.c.b16 %v1110, %v1106
    %v1395 = vpack.c.b16 %v1115, %v1111
    %v1396 = vpack.c.b16 %v1116, %v1112
    %v1397 = vpack.c.b16 %v1117, %v1113
    %v1398 = vpack.c.b16 %v1118, %v1114
    %v1399 = vpack.c.b16 %v1123, %v1119
    %v1400 = vpack.c.b16 %v1124, %v1120
    %v1401 = vpack.c.b16 %v1125, %v1121
    %v1402 = vpack.c.b16 %v1126, %v1122
    %v1403 = vpack.c.b16 %v1131, %v1127
    %v1404 = vpack.c.b16 %v1132, %v1128
    %v1405 = vpack.c.b16 %v1133, %v1129
    %v1406 = vpack.c.b16 %v1134, %v1130
    %v1407 = vpack.c.b16 %v1139, %v1135
    %v1408 = vpack.c.b16 %v1140, %v1136
    %v1409 = vpack.c.b16 %v1141, %v1137
    %v1410 = vpack.c.b16 %v1142, %v1138
    %v1411 = vpack.c.b16 %v1147, %v1143
    %v1412 = vpack.c.b16 %v1148, %v1144
    %v1413 = vpack.c.b16 %v1149, %v1145
    %v1414 = vpack.c.b16 %v1150, %v1146
    %v1415 = vpack.c.b16 %v1155, %v1151
    %v1416 = vpack.c.b16 %v1156, %v1152
    %v1417 = vpack.c.b16 %v1157, %v1153
    %v1418 = vpack.c.b16 %v1158, %v1154
    %v1419 = vpack.c.b16 %v1163, %v1159
    %v1420 = vpack.c.b16 %v1164, %v1160
    %v1421 = vpack.c.b16 %v1165, %v1161
    %v1422 = vpack.c.b16 %v1166, %v1162
    %1679 = vmatpush.bf16.msra.mxu0 %v1195
    %1680 = vmatpush.bf16.msra.mxu0 %v1191
    %1681 = vmatpush.bf16.msra.mxu0 %v1187
    %1682 = vmatpush.bf16.msra.mxu0 %v1183
    %1683 = vmatpush.bf16.msra.mxu0 %v1179
    %1684 = vmatpush.bf16.msra.mxu0 %v1175
    %1685 = vmatpush.bf16.msra.mxu0 %v1171
    %1686 = vmatpush.bf16.msra.mxu0 %v1167
    %1687 = vmatmul.bf16.gmra.mxu0 %v383
    %v1688 = vpop.f32.mrf.mxu0
    %v1689 = vadd.f32 %v363, %v1688
    %v1690 = vpop.f32.mrf.mxu0
    %1691 = vdwg.mxu0
    %1692 = vmatpush.bf16.msra.mxu0 %v1227
    %1693 = vmatpush.bf16.msra.mxu0 %v1223
    %1694 = vmatpush.bf16.msra.mxu0 %v1219
    %1695 = vmatpush.bf16.msra.mxu0 %v1215
    %1696 = vmatpush.bf16.msra.mxu0 %v1211
    %1697 = vmatpush.bf16.msra.mxu0 %v1207
    %1698 = vmatpush.bf16.msra.mxu0 %v1203
    %1699 = vmatpush.bf16.msra.mxu0 %v1199
    %1700 = vmatmul.bf16.gmra.mxu0 %v384
    %v1701 = vpop.f32.mrf.mxu0
    %v1702 = vadd.f32 %v1689, %v1701
    %v1703 = vpop.f32.mrf.mxu0
    %1704 = vdwg.mxu0
    %1705 = vmatpush.bf16.msra.mxu0 %v1259
    %1706 = vmatpush.bf16.msra.mxu0 %v1255
    %1707 = vmatpush.bf16.msra.mxu0 %v1251
    %1708 = vmatpush.bf16.msra.mxu0 %v1247
    %1709 = vmatpush.bf16.msra.mxu0 %v1243
    %1710 = vmatpush.bf16.msra.mxu0 %v1239
    %1711 = vmatpush.bf16.msra.mxu0 %v1235
    %1712 = vmatpush.bf16.msra.mxu0 %v1231
    %1713 = vmatmul.bf16.gmra.mxu0 %v385
    %v1714 = vpop.f32.mrf.mxu0
    %v1715 = vadd.f32 %v1702, %v1714
    %v1716 = vpop.f32.mrf.mxu0
    %1717 = vdwg.mxu0
    %1718 = vmatpush.bf16.msra.mxu0 %v1291
    %1719 = vmatpush.bf16.msra.mxu0 %v1287
    %1720 = vmatpush.bf16.msra.mxu0 %v1283
    %1721 = vmatpush.bf16.msra.mxu0 %v1279
    %1722 = vmatpush.bf16.msra.mxu0 %v1275
    %1723 = vmatpush.bf16.msra.mxu0 %v1271
    %1724 = vmatpush.bf16.msra.mxu0 %v1267
    %1725 = vmatpush.bf16.msra.mxu0 %v1263
    %1726 = vmatmul.bf16.gmra.mxu0 %v386
    %v1727 = vpop.f32.mrf.mxu0
    %v1728 = vadd.f32 %v1715, %v1727
    %v1729 = vpop.f32.mrf.mxu0
    %1730 = vdwg.mxu0
    %1731 = vmatpush.bf16.msra.mxu0 %v1323
    %1732 = vmatpush.bf16.msra.mxu0 %v1319
    %1733 = vmatpush.bf16.msra.mxu0 %v1315
    %1734 = vmatpush.bf16.msra.mxu0 %v1311
    %1735 = vmatpush.bf16.msra.mxu0 %v1307
    %1736 = vmatpush.bf16.msra.mxu0 %v1303
    %1737 = vmatpush.bf16.msra.mxu0 %v1299
    %1738 = vmatpush.bf16.msra.mxu0 %v1295
    %1739 = vmatmul.bf16.gmra.mxu0 %v387
    %v1740 = vpop.f32.mrf.mxu0
    %v1741 = vadd.f32 %v1728, %v1740
    %v1742 = vpop.f32.mrf.mxu0
    %1743 = vdwg.mxu0
    %1744 = vmatpush.bf16.msra.mxu0 %v1355
    %1745 = vmatpush.bf16.msra.mxu0 %v1351
    %1746 = vmatpush.bf16.msra.mxu0 %v1347
    %1747 = vmatpush.bf16.msra.mxu0 %v1343
    %1748 = vmatpush.bf16.msra.mxu0 %v1339
    %1749 = vmatpush.bf16.msra.mxu0 %v1335
    %1750 = vmatpush.bf16.msra.mxu0 %v1331
    %1751 = vmatpush.bf16.msra.mxu0 %v1327
    %1752 = vmatmul.bf16.gmra.mxu0 %v388
    %v1753 = vpop.f32.mrf.mxu0
    %v1754 = vadd.f32 %v1741, %v1753
    %v1755 = vpop.f32.mrf.mxu0
    %1756 = vdwg.mxu0
    %1757 = vmatpush.bf16.msra.mxu0 %v1387
    %1758 = vmatpush.bf16.msra.mxu0 %v1383
    %1759 = vmatpush.bf16.msra.mxu0 %v1379
    %1760 = vmatpush.bf16.msra.mxu0 %v1375
    %1761 = vmatpush.bf16.msra.mxu0 %v1371
    %1762 = vmatpush.bf16.msra.mxu0 %v1367
    %1763 = vmatpush.bf16.msra.mxu0 %v1363
    %1764 = vmatpush.bf16.msra.mxu0 %v1359
    %1765 = vmatmul.bf16.gmra.mxu0 %v389
    %v1766 = vpop.f32.mrf.mxu0
    %v1767 = vadd.f32 %v1754, %v1766
    %v1768 = vpop.f32.mrf.mxu0
    %1769 = vdwg.mxu0
    %1770 = vmatpush.bf16.msra.mxu0 %v1419
    %1771 = vmatpush.bf16.msra.mxu0 %v1415
    %1772 = vmatpush.bf16.msra.mxu0 %v1411
    %1773 = vmatpush.bf16.msra.mxu0 %v1407
    %1774 = vmatpush.bf16.msra.mxu0 %v1403
    %1775 = vmatpush.bf16.msra.mxu0 %v1399
    %1776 = vmatpush.bf16.msra.mxu0 %v1395
    %1777 = vmatpush.bf16.msra.mxu0 %v1391
    %1778 = vmatmul.bf16.gmra.mxu0 %v390
    %v1779 = vpop.f32.mrf.mxu0
    %v1780 = vadd.f32 %v1767, %v1779
    %v1781 = vpop.f32.mrf.mxu0
    %1782 = vdwg.mxu0
    %1783 = vmatpush.bf16.msra.mxu0 %v1196
    %1784 = vmatpush.bf16.msra.mxu0 %v1192
    %1785 = vmatpush.bf16.msra.mxu0 %v1188
    %1786 = vmatpush.bf16.msra.mxu0 %v1184
    %1787 = vmatpush.bf16.msra.mxu0 %v1180
    %1788 = vmatpush.bf16.msra.mxu0 %v1176
    %1789 = vmatpush.bf16.msra.mxu0 %v1172
    %1790 = vmatpush.bf16.msra.mxu0 %v1168
    %1791 = vmatmul.bf16.gmra.mxu0 %v383
    %v1792 = vpop.f32.mrf.mxu0
    %v1793 = vadd.f32 %v364, %v1792
    %v1794 = vpop.f32.mrf.mxu0
    %1795 = vdwg.mxu0
    %1796 = vmatpush.bf16.msra.mxu0 %v1228
    %1797 = vmatpush.bf16.msra.mxu0 %v1224
    %1798 = vmatpush.bf16.msra.mxu0 %v1220
    %1799 = vmatpush.bf16.msra.mxu0 %v1216
    %1800 = vmatpush.bf16.msra.mxu0 %v1212
    %1801 = vmatpush.bf16.msra.mxu0 %v1208
    %1802 = vmatpush.bf16.msra.mxu0 %v1204
    %1803 = vmatpush.bf16.msra.mxu0 %v1200
    %1804 = vmatmul.bf16.gmra.mxu0 %v384
    %v1805 = vpop.f32.mrf.mxu0
    %v1806 = vadd.f32 %v1793, %v1805
    %v1807 = vpop.f32.mrf.mxu0
    %1808 = vdwg.mxu0
    %1809 = vmatpush.bf16.msra.mxu0 %v1260
    %1810 = vmatpush.bf16.msra.mxu0 %v1256
    %1811 = vmatpush.bf16.msra.mxu0 %v1252
    %1812 = vmatpush.bf16.msra.mxu0 %v1248
    %1813 = vmatpush.bf16.msra.mxu0 %v1244
    %1814 = vmatpush.bf16.msra.mxu0 %v1240
    %1815 = vmatpush.bf16.msra.mxu0 %v1236
    %1816 = vmatpush.bf16.msra.mxu0 %v1232
    %1817 = vmatmul.bf16.gmra.mxu0 %v385
    %v1818 = vpop.f32.mrf.mxu0
    %v1819 = vadd.f32 %v1806, %v1818
    %v1820 = vpop.f32.mrf.mxu0
    %1821 = vdwg.mxu0
    %1822 = vmatpush.bf16.msra.mxu0 %v1292
    %1823 = vmatpush.bf16.msra.mxu0 %v1288
    %1824 = vmatpush.bf16.msra.mxu0 %v1284
    %1825 = vmatpush.bf16.msra.mxu0 %v1280
    %1826 = vmatpush.bf16.msra.mxu0 %v1276
    %1827 = vmatpush.bf16.msra.mxu0 %v1272
    %1828 = vmatpush.bf16.msra.mxu0 %v1268
    %1829 = vmatpush.bf16.msra.mxu0 %v1264
    %1830 = vmatmul.bf16.gmra.mxu0 %v386
    %v1831 = vpop.f32.mrf.mxu0
    %v1832 = vadd.f32 %v1819, %v1831
    %v1833 = vpop.f32.mrf.mxu0
    %1834 = vdwg.mxu0
    %1835 = vmatpush.bf16.msra.mxu0 %v1324
    %1836 = vmatpush.bf16.msra.mxu0 %v1320
    %1837 = vmatpush.bf16.msra.mxu0 %v1316
    %1838 = vmatpush.bf16.msra.mxu0 %v1312
    %1839 = vmatpush.bf16.msra.mxu0 %v1308
    %1840 = vmatpush.bf16.msra.mxu0 %v1304
    %1841 = vmatpush.bf16.msra.mxu0 %v1300
    %1842 = vmatpush.bf16.msra.mxu0 %v1296
    %1843 = vmatmul.bf16.gmra.mxu0 %v387
    %v1844 = vpop.f32.mrf.mxu0
    %v1845 = vadd.f32 %v1832, %v1844
    %v1846 = vpop.f32.mrf.mxu0
    %1847 = vdwg.mxu0
    %1848 = vmatpush.bf16.msra.mxu0 %v1356
    %1849 = vmatpush.bf16.msra.mxu0 %v1352
    %1850 = vmatpush.bf16.msra.mxu0 %v1348
    %1851 = vmatpush.bf16.msra.mxu0 %v1344
    %1852 = vmatpush.bf16.msra.mxu0 %v1340
    %1853 = vmatpush.bf16.msra.mxu0 %v1336
    %1854 = vmatpush.bf16.msra.mxu0 %v1332
    %1855 = vmatpush.bf16.msra.mxu0 %v1328
    %1856 = vmatmul.bf16.gmra.mxu0 %v388
    %v1857 = vpop.f32.mrf.mxu0
    %v1858 = vadd.f32 %v1845, %v1857
    %v1859 = vpop.f32.mrf.mxu0
    %1860 = vdwg.mxu0
    %1861 = vmatpush.bf16.msra.mxu0 %v1388
    %1862 = vmatpush.bf16.msra.mxu0 %v1384
    %1863 = vmatpush.bf16.msra.mxu0 %v1380
    %1864 = vmatpush.bf16.msra.mxu0 %v1376
    %1865 = vmatpush.bf16.msra.mxu0 %v1372
    %1866 = vmatpush.bf16.msra.mxu0 %v1368
    %1867 = vmatpush.bf16.msra.mxu0 %v1364
    %1868 = vmatpush.bf16.msra.mxu0 %v1360
    %1869 = vmatmul.bf16.gmra.mxu0 %v389
    %v1870 = vpop.f32.mrf.mxu0
    %v1871 = vadd.f32 %v1858, %v1870
    %v1872 = vpop.f32.mrf.mxu0
    %1873 = vdwg.mxu0
    %1874 = vmatpush.bf16.msra.mxu0 %v1420
    %1875 = vmatpush.bf16.msra.mxu0 %v1416
    %1876 = vmatpush.bf16.msra.mxu0 %v1412
    %1877 = vmatpush.bf16.msra.mxu0 %v1408
    %1878 = vmatpush.bf16.msra.mxu0 %v1404
    %1879 = vmatpush.bf16.msra.mxu0 %v1400
    %1880 = vmatpush.bf16.msra.mxu0 %v1396
    %1881 = vmatpush.bf16.msra.mxu0 %v1392
    %1882 = vmatmul.bf16.gmra.mxu0 %v390
    %v1883 = vpop.f32.mrf.mxu0
    %v1884 = vadd.f32 %v1871, %v1883
    %v1885 = vpop.f32.mrf.mxu0
    %1886 = vdwg.mxu0
    %1887 = vmatpush.bf16.msra.mxu0 %v1197
    %1888 = vmatpush.bf16.msra.mxu0 %v1193
    %1889 = vmatpush.bf16.msra.mxu0 %v1189
    %1890 = vmatpush.bf16.msra.mxu0 %v1185
    %1891 = vmatpush.bf16.msra.mxu0 %v1181
    %1892 = vmatpush.bf16.msra.mxu0 %v1177
    %1893 = vmatpush.bf16.msra.mxu0 %v1173
    %1894 = vmatpush.bf16.msra.mxu0 %v1169
    %1895 = vmatmul.bf16.gmra.mxu0 %v383
    %v1896 = vpop.f32.mrf.mxu0
    %v1897 = vadd.f32 %v365, %v1896
    %v1898 = vpop.f32.mrf.mxu0
    %1899 = vdwg.mxu0
    %1900 = vmatpush.bf16.msra.mxu0 %v1229
    %1901 = vmatpush.bf16.msra.mxu0 %v1225
    %1902 = vmatpush.bf16.msra.mxu0 %v1221
    %1903 = vmatpush.bf16.msra.mxu0 %v1217
    %1904 = vmatpush.bf16.msra.mxu0 %v1213
    %1905 = vmatpush.bf16.msra.mxu0 %v1209
    %1906 = vmatpush.bf16.msra.mxu0 %v1205
    %1907 = vmatpush.bf16.msra.mxu0 %v1201
    %1908 = vmatmul.bf16.gmra.mxu0 %v384
    %v1909 = vpop.f32.mrf.mxu0
    %v1910 = vadd.f32 %v1897, %v1909
    %v1911 = vpop.f32.mrf.mxu0
    %1912 = vdwg.mxu0
    %1913 = vmatpush.bf16.msra.mxu0 %v1261
    %1914 = vmatpush.bf16.msra.mxu0 %v1257
    %1915 = vmatpush.bf16.msra.mxu0 %v1253
    %1916 = vmatpush.bf16.msra.mxu0 %v1249
    %1917 = vmatpush.bf16.msra.mxu0 %v1245
    %1918 = vmatpush.bf16.msra.mxu0 %v1241
    %1919 = vmatpush.bf16.msra.mxu0 %v1237
    %1920 = vmatpush.bf16.msra.mxu0 %v1233
    %1921 = vmatmul.bf16.gmra.mxu0 %v385
    %v1922 = vpop.f32.mrf.mxu0
    %v1923 = vadd.f32 %v1910, %v1922
    %v1924 = vpop.f32.mrf.mxu0
    %1925 = vdwg.mxu0
    %1926 = vmatpush.bf16.msra.mxu0 %v1293
    %1927 = vmatpush.bf16.msra.mxu0 %v1289
    %1928 = vmatpush.bf16.msra.mxu0 %v1285
    %1929 = vmatpush.bf16.msra.mxu0 %v1281
    %1930 = vmatpush.bf16.msra.mxu0 %v1277
    %1931 = vmatpush.bf16.msra.mxu0 %v1273
    %1932 = vmatpush.bf16.msra.mxu0 %v1269
    %1933 = vmatpush.bf16.msra.mxu0 %v1265
    %1934 = vmatmul.bf16.gmra.mxu0 %v386
    %v1935 = vpop.f32.mrf.mxu0
    %v1936 = vadd.f32 %v1923, %v1935
    %v1937 = vpop.f32.mrf.mxu0
    %1938 = vdwg.mxu0
    %1939 = vmatpush.bf16.msra.mxu0 %v1325
    %1940 = vmatpush.bf16.msra.mxu0 %v1321
    %1941 = vmatpush.bf16.msra.mxu0 %v1317
    %1942 = vmatpush.bf16.msra.mxu0 %v1313
    %1943 = vmatpush.bf16.msra.mxu0 %v1309
    %1944 = vmatpush.bf16.msra.mxu0 %v1305
    %1945 = vmatpush.bf16.msra.mxu0 %v1301
    %1946 = vmatpush.bf16.msra.mxu0 %v1297
    %1947 = vmatmul.bf16.gmra.mxu0 %v387
    %v1948 = vpop.f32.mrf.mxu0
    %v1949 = vadd.f32 %v1936, %v1948
    %v1950 = vpop.f32.mrf.mxu0
    %1951 = vdwg.mxu0
    %1952 = vmatpush.bf16.msra.mxu0 %v1357
    %1953 = vmatpush.bf16.msra.mxu0 %v1353
    %1954 = vmatpush.bf16.msra.mxu0 %v1349
    %1955 = vmatpush.bf16.msra.mxu0 %v1345
    %1956 = vmatpush.bf16.msra.mxu0 %v1341
    %1957 = vmatpush.bf16.msra.mxu0 %v1337
    %1958 = vmatpush.bf16.msra.mxu0 %v1333
    %1959 = vmatpush.bf16.msra.mxu0 %v1329
    %1960 = vmatmul.bf16.gmra.mxu0 %v388
    %v1961 = vpop.f32.mrf.mxu0
    %v1962 = vadd.f32 %v1949, %v1961
    %v1963 = vpop.f32.mrf.mxu0
    %1964 = vdwg.mxu0
    %1965 = vmatpush.bf16.msra.mxu0 %v1389
    %1966 = vmatpush.bf16.msra.mxu0 %v1385
    %1967 = vmatpush.bf16.msra.mxu0 %v1381
    %1968 = vmatpush.bf16.msra.mxu0 %v1377
    %1969 = vmatpush.bf16.msra.mxu0 %v1373
    %1970 = vmatpush.bf16.msra.mxu0 %v1369
    %1971 = vmatpush.bf16.msra.mxu0 %v1365
    %1972 = vmatpush.bf16.msra.mxu0 %v1361
    %1973 = vmatmul.bf16.gmra.mxu0 %v389
    %v1974 = vpop.f32.mrf.mxu0
    %v1975 = vadd.f32 %v1962, %v1974
    %v1976 = vpop.f32.mrf.mxu0
    %1977 = vdwg.mxu0
    %1978 = vmatpush.bf16.msra.mxu0 %v1421
    %1979 = vmatpush.bf16.msra.mxu0 %v1417
    %1980 = vmatpush.bf16.msra.mxu0 %v1413
    %1981 = vmatpush.bf16.msra.mxu0 %v1409
    %1982 = vmatpush.bf16.msra.mxu0 %v1405
    %1983 = vmatpush.bf16.msra.mxu0 %v1401
    %1984 = vmatpush.bf16.msra.mxu0 %v1397
    %1985 = vmatpush.bf16.msra.mxu0 %v1393
    %1986 = vmatmul.bf16.gmra.mxu0 %v390
    %v1987 = vpop.f32.mrf.mxu0
    %v1988 = vadd.f32 %v1975, %v1987
    %v1989 = vpop.f32.mrf.mxu0
    %1990 = vdwg.mxu0
    %1991 = vmatpush.bf16.msra.mxu0 %v1198
    %1992 = vmatpush.bf16.msra.mxu0 %v1194
    %1993 = vmatpush.bf16.msra.mxu0 %v1190
    %1994 = vmatpush.bf16.msra.mxu0 %v1186
    %1995 = vmatpush.bf16.msra.mxu0 %v1182
    %1996 = vmatpush.bf16.msra.mxu0 %v1178
    %1997 = vmatpush.bf16.msra.mxu0 %v1174
    %1998 = vmatpush.bf16.msra.mxu0 %v1170
    %1999 = vmatmul.bf16.gmra.mxu0 %v383
    %v2000 = vpop.f32.mrf.mxu0
    %v2001 = vadd.f32 %v366, %v2000
    %v2002 = vpop.f32.mrf.mxu0
    %2003 = vdwg.mxu0
    %2004 = vmatpush.bf16.msra.mxu0 %v1230
    %2005 = vmatpush.bf16.msra.mxu0 %v1226
    %2006 = vmatpush.bf16.msra.mxu0 %v1222
    %2007 = vmatpush.bf16.msra.mxu0 %v1218
    %2008 = vmatpush.bf16.msra.mxu0 %v1214
    %2009 = vmatpush.bf16.msra.mxu0 %v1210
    %2010 = vmatpush.bf16.msra.mxu0 %v1206
    %2011 = vmatpush.bf16.msra.mxu0 %v1202
    %2012 = vmatmul.bf16.gmra.mxu0 %v384
    %v2013 = vpop.f32.mrf.mxu0
    %v2014 = vadd.f32 %v2001, %v2013
    %v2015 = vpop.f32.mrf.mxu0
    %2016 = vdwg.mxu0
    %2017 = vmatpush.bf16.msra.mxu0 %v1262
    %2018 = vmatpush.bf16.msra.mxu0 %v1258
    %2019 = vmatpush.bf16.msra.mxu0 %v1254
    %2020 = vmatpush.bf16.msra.mxu0 %v1250
    %2021 = vmatpush.bf16.msra.mxu0 %v1246
    %2022 = vmatpush.bf16.msra.mxu0 %v1242
    %2023 = vmatpush.bf16.msra.mxu0 %v1238
    %2024 = vmatpush.bf16.msra.mxu0 %v1234
    %2025 = vmatmul.bf16.gmra.mxu0 %v385
    %v2026 = vpop.f32.mrf.mxu0
    %v2027 = vadd.f32 %v2014, %v2026
    %v2028 = vpop.f32.mrf.mxu0
    %2029 = vdwg.mxu0
    %2030 = vmatpush.bf16.msra.mxu0 %v1294
    %2031 = vmatpush.bf16.msra.mxu0 %v1290
    %2032 = vmatpush.bf16.msra.mxu0 %v1286
    %2033 = vmatpush.bf16.msra.mxu0 %v1282
    %2034 = vmatpush.bf16.msra.mxu0 %v1278
    %2035 = vmatpush.bf16.msra.mxu0 %v1274
    %2036 = vmatpush.bf16.msra.mxu0 %v1270
    %2037 = vmatpush.bf16.msra.mxu0 %v1266
    %2038 = vmatmul.bf16.gmra.mxu0 %v386
    %v2039 = vpop.f32.mrf.mxu0
    %v2040 = vadd.f32 %v2027, %v2039
    %v2041 = vpop.f32.mrf.mxu0
    %2042 = vdwg.mxu0
    %2043 = vmatpush.bf16.msra.mxu0 %v1326
    %2044 = vmatpush.bf16.msra.mxu0 %v1322
    %2045 = vmatpush.bf16.msra.mxu0 %v1318
    %2046 = vmatpush.bf16.msra.mxu0 %v1314
    %2047 = vmatpush.bf16.msra.mxu0 %v1310
    %2048 = vmatpush.bf16.msra.mxu0 %v1306
    %2049 = vmatpush.bf16.msra.mxu0 %v1302
    %2050 = vmatpush.bf16.msra.mxu0 %v1298
    %2051 = vmatmul.bf16.gmra.mxu0 %v387
    %v2052 = vpop.f32.mrf.mxu0
    %v2053 = vadd.f32 %v2040, %v2052
    %v2054 = vpop.f32.mrf.mxu0
    %2055 = vdwg.mxu0
    %2056 = vmatpush.bf16.msra.mxu0 %v1358
    %2057 = vmatpush.bf16.msra.mxu0 %v1354
    %2058 = vmatpush.bf16.msra.mxu0 %v1350
    %2059 = vmatpush.bf16.msra.mxu0 %v1346
    %2060 = vmatpush.bf16.msra.mxu0 %v1342
    %2061 = vmatpush.bf16.msra.mxu0 %v1338
    %2062 = vmatpush.bf16.msra.mxu0 %v1334
    %2063 = vmatpush.bf16.msra.mxu0 %v1330
    %2064 = vmatmul.bf16.gmra.mxu0 %v388
    %v2065 = vpop.f32.mrf.mxu0
    %v2066 = vadd.f32 %v2053, %v2065
    %v2067 = vpop.f32.mrf.mxu0
    %2068 = vdwg.mxu0
    %2069 = vmatpush.bf16.msra.mxu0 %v1390
    %2070 = vmatpush.bf16.msra.mxu0 %v1386
    %2071 = vmatpush.bf16.msra.mxu0 %v1382
    %2072 = vmatpush.bf16.msra.mxu0 %v1378
    %2073 = vmatpush.bf16.msra.mxu0 %v1374
    %2074 = vmatpush.bf16.msra.mxu0 %v1370
    %2075 = vmatpush.bf16.msra.mxu0 %v1366
    %2076 = vmatpush.bf16.msra.mxu0 %v1362
    %2077 = vmatmul.bf16.gmra.mxu0 %v389
    %v2078 = vpop.f32.mrf.mxu0
    %v2079 = vadd.f32 %v2066, %v2078
    %v2080 = vpop.f32.mrf.mxu0
    %2081 = vdwg.mxu0
    %2082 = vmatpush.bf16.msra.mxu0 %v1422
    %2083 = vmatpush.bf16.msra.mxu0 %v1418
    %2084 = vmatpush.bf16.msra.mxu0 %v1414
    %2085 = vmatpush.bf16.msra.mxu0 %v1410
    %2086 = vmatpush.bf16.msra.mxu0 %v1406
    %2087 = vmatpush.bf16.msra.mxu0 %v1402
    %2088 = vmatpush.bf16.msra.mxu0 %v1398
    %2089 = vmatpush.bf16.msra.mxu0 %v1394
    %2090 = vmatmul.bf16.gmra.mxu0 %v390
    %v2091 = vpop.f32.mrf.mxu0
    %v2092 = vadd.f32 %v2079, %v2091
    %v2093 = vpop.f32.mrf.mxu0
    %2094 = vdwg.mxu0
    %vm2095 = vcmp.gt.f32.partialorder %v1780, 0.0
    %vm2096 = vcmp.gt.f32.partialorder %v1884, 0.0
    %vm2097 = vcmp.gt.f32.partialorder %v1988, 0.0
    %vm2098 = vcmp.gt.f32.partialorder %v2092, 0.0
    %v2099 = vmul.f32 %v1780, 0.2
    %v2100 = vmul.f32 %v1884, 0.2
    %v2101 = vmul.f32 %v1988, 0.2
    %v2102 = vmul.f32 %v2092, 0.2
    %v2103 = vsel %vm2095, %v1780, %v2099
    %v2104 = vsel %vm2096, %v1884, %v2100
    %v2105 = vsel %vm2097, %v1988, %v2101
    %v2106 = vsel %vm2098, %v2092, %v2102
    %v2107 = vpack.c.bf16 %v2103, %v2103
    %v2108 = vpack.c.bf16 %v2104, %v2104
    %v2109 = vpack.c.bf16 %v2105, %v2105
    %v2110 = vpack.c.bf16 %v2106, %v2106
    %v2111 = vld [vmem:[#allocation8] sm:$0xff]
    %v2112 = vld [vmem:[#allocation8 + $0x8] sm:$0xff]
    %v2113 = vld [vmem:[#allocation8 + $0x10] sm:$0xff]
    %v2114 = vld [vmem:[#allocation8 + $0x18] sm:$0xff]
    %v2115 = vld [vmem:[#allocation8 + $0x20] sm:$0xff]
    %v2116 = vld [vmem:[#allocation8 + $0x28] sm:$0xff]
    %v2117 = vld [vmem:[#allocation8 + $0x30] sm:$0xff]
    %v2118 = vld [vmem:[#allocation8 + $0x38] sm:$0xff]
    %v2119 = vld [vmem:[#allocation8 + $0x40] sm:$0xff]
    %v2120 = vld [vmem:[#allocation8 + $0x48] sm:$0xff]
    %v2121 = vld [vmem:[#allocation8 + $0x50] sm:$0xff]
    %v2122 = vld [vmem:[#allocation8 + $0x58] sm:$0xff]
    %v2123 = vld [vmem:[#allocation8 + $0x60] sm:$0xff]
    %v2124 = vld [vmem:[#allocation8 + $0x68] sm:$0xff]
    %v2125 = vld [vmem:[#allocation8 + $0x70] sm:$0xff]
    %v2126 = vld [vmem:[#allocation8 + $0x78] sm:$0xff]
    %v2127 = vld [vmem:[#allocation8 + $0x80] sm:$0xff]
    %v2128 = vld [vmem:[#allocation8 + $0x88] sm:$0xff]
    %v2129 = vld [vmem:[#allocation8 + $0x90] sm:$0xff]
    %v2130 = vld [vmem:[#allocation8 + $0x98] sm:$0xff]
    %v2131 = vld [vmem:[#allocation8 + $0xa0] sm:$0xff]
    %v2132 = vld [vmem:[#allocation8 + $0xa8] sm:$0xff]
    %v2133 = vld [vmem:[#allocation8 + $0xb0] sm:$0xff]
    %v2134 = vld [vmem:[#allocation8 + $0xb8] sm:$0xff]
    %v2135 = vld [vmem:[#allocation8 + $0xc0] sm:$0xff]
    %v2136 = vld [vmem:[#allocation8 + $0xc8] sm:$0xff]
    %v2137 = vld [vmem:[#allocation8 + $0xd0] sm:$0xff]
    %v2138 = vld [vmem:[#allocation8 + $0xd8] sm:$0xff]
    %v2139 = vld [vmem:[#allocation8 + $0xe0] sm:$0xff]
    %v2140 = vld [vmem:[#allocation8 + $0xe8] sm:$0xff]
    %v2141 = vld [vmem:[#allocation8 + $0xf0] sm:$0xff]
    %v2142 = vld [vmem:[#allocation8 + $0xf8] sm:$0xff]
    %v2143 = vld [vmem:[#allocation8 + $0x100] sm:$0xff]
    %v2144 = vld [vmem:[#allocation8 + $0x108] sm:$0xff]
    %v2145 = vld [vmem:[#allocation8 + $0x110] sm:$0xff]
    %v2146 = vld [vmem:[#allocation8 + $0x118] sm:$0xff]
    %v2147 = vld [vmem:[#allocation8 + $0x120] sm:$0xff]
    %v2148 = vld [vmem:[#allocation8 + $0x128] sm:$0xff]
    %v2149 = vld [vmem:[#allocation8 + $0x130] sm:$0xff]
    %v2150 = vld [vmem:[#allocation8 + $0x138] sm:$0xff]
    %v2151 = vld [vmem:[#allocation8 + $0x140] sm:$0xff]
    %v2152 = vld [vmem:[#allocation8 + $0x148] sm:$0xff]
    %v2153 = vld [vmem:[#allocation8 + $0x150] sm:$0xff]
    %v2154 = vld [vmem:[#allocation8 + $0x158] sm:$0xff]
    %v2155 = vld [vmem:[#allocation8 + $0x160] sm:$0xff]
    %v2156 = vld [vmem:[#allocation8 + $0x168] sm:$0xff]
    %v2157 = vld [vmem:[#allocation8 + $0x170] sm:$0xff]
    %v2158 = vld [vmem:[#allocation8 + $0x178] sm:$0xff]
    %v2159 = vld [vmem:[#allocation8 + $0x180] sm:$0xff]
    %v2160 = vld [vmem:[#allocation8 + $0x188] sm:$0xff]
    %v2161 = vld [vmem:[#allocation8 + $0x190] sm:$0xff]
    %v2162 = vld [vmem:[#allocation8 + $0x198] sm:$0xff]
    %v2163 = vld [vmem:[#allocation8 + $0x1a0] sm:$0xff]
    %v2164 = vld [vmem:[#allocation8 + $0x1a8] sm:$0xff]
    %v2165 = vld [vmem:[#allocation8 + $0x1b0] sm:$0xff]
    %v2166 = vld [vmem:[#allocation8 + $0x1b8] sm:$0xff]
    %v2167 = vld [vmem:[#allocation8 + $0x1c0] sm:$0xff]
    %v2168 = vld [vmem:[#allocation8 + $0x1c8] sm:$0xff]
    %v2169 = vld [vmem:[#allocation8 + $0x1d0] sm:$0xff]
    %v2170 = vld [vmem:[#allocation8 + $0x1d8] sm:$0xff]
    %v2171 = vld [vmem:[#allocation8 + $0x1e0] sm:$0xff]
    %v2172 = vld [vmem:[#allocation8 + $0x1e8] sm:$0xff]
    %v2173 = vld [vmem:[#allocation8 + $0x1f0] sm:$0xff]
    %v2174 = vld [vmem:[#allocation8 + $0x1f8] sm:$0xff]
    %v2175 = vld [vmem:[%s4] sm:$0x3]
    %v2177 = vperm.slane %v2175, 0
    %v2178 = vperm.slane %v2175, 1
    %v2245 = vunpack.c.l.b16 %v2111
    %v2246 = vunpack.c.h.b16 %v2111
    %v2247 = vunpack.c.l.b16 %v2112
    %v2248 = vunpack.c.h.b16 %v2112
    %v2249 = vunpack.c.l.b16 %v2113
    %v2250 = vunpack.c.h.b16 %v2113
    %v2251 = vunpack.c.l.b16 %v2114
    %v2252 = vunpack.c.h.b16 %v2114
    %v2253 = vunpack.c.l.b16 %v2115
    %v2254 = vunpack.c.h.b16 %v2115
    %v2255 = vunpack.c.l.b16 %v2116
    %v2256 = vunpack.c.h.b16 %v2116
    %v2257 = vunpack.c.l.b16 %v2117
    %v2258 = vunpack.c.h.b16 %v2117
    %v2259 = vunpack.c.l.b16 %v2118
    %v2260 = vunpack.c.h.b16 %v2118
    %v2261 = vunpack.c.l.b16 %v2119
    %v2262 = vunpack.c.h.b16 %v2119
    %v2263 = vunpack.c.l.b16 %v2120
    %v2264 = vunpack.c.h.b16 %v2120
    %v2265 = vunpack.c.l.b16 %v2121
    %v2266 = vunpack.c.h.b16 %v2121
    %v2267 = vunpack.c.l.b16 %v2122
    %v2268 = vunpack.c.h.b16 %v2122
    %v2269 = vunpack.c.l.b16 %v2123
    %v2270 = vunpack.c.h.b16 %v2123
    %v2271 = vunpack.c.l.b16 %v2124
    %v2272 = vunpack.c.h.b16 %v2124
    %v2273 = vunpack.c.l.b16 %v2125
    %v2274 = vunpack.c.h.b16 %v2125
    %v2275 = vunpack.c.l.b16 %v2126
    %v2276 = vunpack.c.h.b16 %v2126
    %v2277 = vunpack.c.l.b16 %v2127
    %v2278 = vunpack.c.h.b16 %v2127
    %v2279 = vunpack.c.l.b16 %v2128
    %v2280 = vunpack.c.h.b16 %v2128
    %v2281 = vunpack.c.l.b16 %v2129
    %v2282 = vunpack.c.h.b16 %v2129
    %v2283 = vunpack.c.l.b16 %v2130
    %v2284 = vunpack.c.h.b16 %v2130
    %v2285 = vunpack.c.l.b16 %v2131
    %v2286 = vunpack.c.h.b16 %v2131
    %v2287 = vunpack.c.l.b16 %v2132
    %v2288 = vunpack.c.h.b16 %v2132
    %v2289 = vunpack.c.l.b16 %v2133
    %v2290 = vunpack.c.h.b16 %v2133
    %v2291 = vunpack.c.l.b16 %v2134
    %v2292 = vunpack.c.h.b16 %v2134
    %v2293 = vunpack.c.l.b16 %v2135
    %v2294 = vunpack.c.h.b16 %v2135
    %v2295 = vunpack.c.l.b16 %v2136
    %v2296 = vunpack.c.h.b16 %v2136
    %v2297 = vunpack.c.l.b16 %v2137
    %v2298 = vunpack.c.h.b16 %v2137
    %v2299 = vunpack.c.l.b16 %v2138
    %v2300 = vunpack.c.h.b16 %v2138
    %v2301 = vunpack.c.l.b16 %v2139
    %v2302 = vunpack.c.h.b16 %v2139
    %v2303 = vunpack.c.l.b16 %v2140
    %v2304 = vunpack.c.h.b16 %v2140
    %v2305 = vunpack.c.l.b16 %v2141
    %v2306 = vunpack.c.h.b16 %v2141
    %v2307 = vunpack.c.l.b16 %v2142
    %v2308 = vunpack.c.h.b16 %v2142
    %v2309 = vunpack.c.l.b16 %v2143
    %v2310 = vunpack.c.h.b16 %v2143
    %v2311 = vunpack.c.l.b16 %v2144
    %v2312 = vunpack.c.h.b16 %v2144
    %v2313 = vunpack.c.l.b16 %v2145
    %v2314 = vunpack.c.h.b16 %v2145
    %v2315 = vunpack.c.l.b16 %v2146
    %v2316 = vunpack.c.h.b16 %v2146
    %v2317 = vunpack.c.l.b16 %v2147
    %v2318 = vunpack.c.h.b16 %v2147
    %v2319 = vunpack.c.l.b16 %v2148
    %v2320 = vunpack.c.h.b16 %v2148
    %v2321 = vunpack.c.l.b16 %v2149
    %v2322 = vunpack.c.h.b16 %v2149
    %v2323 = vunpack.c.l.b16 %v2150
    %v2324 = vunpack.c.h.b16 %v2150
    %v2325 = vunpack.c.l.b16 %v2151
    %v2326 = vunpack.c.h.b16 %v2151
    %v2327 = vunpack.c.l.b16 %v2152
    %v2328 = vunpack.c.h.b16 %v2152
    %v2329 = vunpack.c.l.b16 %v2153
    %v2330 = vunpack.c.h.b16 %v2153
    %v2331 = vunpack.c.l.b16 %v2154
    %v2332 = vunpack.c.h.b16 %v2154
    %v2333 = vunpack.c.l.b16 %v2155
    %v2334 = vunpack.c.h.b16 %v2155
    %v2335 = vunpack.c.l.b16 %v2156
    %v2336 = vunpack.c.h.b16 %v2156
    %v2337 = vunpack.c.l.b16 %v2157
    %v2338 = vunpack.c.h.b16 %v2157
    %v2339 = vunpack.c.l.b16 %v2158
    %v2340 = vunpack.c.h.b16 %v2158
    %v2341 = vunpack.c.l.b16 %v2159
    %v2342 = vunpack.c.h.b16 %v2159
    %v2343 = vunpack.c.l.b16 %v2160
    %v2344 = vunpack.c.h.b16 %v2160
    %v2345 = vunpack.c.l.b16 %v2161
    %v2346 = vunpack.c.h.b16 %v2161
    %v2347 = vunpack.c.l.b16 %v2162
    %v2348 = vunpack.c.h.b16 %v2162
    %v2349 = vunpack.c.l.b16 %v2163
    %v2350 = vunpack.c.h.b16 %v2163
    %v2351 = vunpack.c.l.b16 %v2164
    %v2352 = vunpack.c.h.b16 %v2164
    %v2353 = vunpack.c.l.b16 %v2165
    %v2354 = vunpack.c.h.b16 %v2165
    %v2355 = vunpack.c.l.b16 %v2166
    %v2356 = vunpack.c.h.b16 %v2166
    %v2357 = vunpack.c.l.b16 %v2167
    %v2358 = vunpack.c.h.b16 %v2167
    %v2359 = vunpack.c.l.b16 %v2168
    %v2360 = vunpack.c.h.b16 %v2168
    %v2361 = vunpack.c.l.b16 %v2169
    %v2362 = vunpack.c.h.b16 %v2169
    %v2363 = vunpack.c.l.b16 %v2170
    %v2364 = vunpack.c.h.b16 %v2170
    %v2365 = vunpack.c.l.b16 %v2171
    %v2366 = vunpack.c.h.b16 %v2171
    %v2367 = vunpack.c.l.b16 %v2172
    %v2368 = vunpack.c.h.b16 %v2172
    %v2369 = vunpack.c.l.b16 %v2173
    %v2370 = vunpack.c.h.b16 %v2173
    %v2371 = vunpack.c.l.b16 %v2174
    %v2372 = vunpack.c.h.b16 %v2174
    %v2373 = vpack.c.b16 %v2247, %v2245
    %v2374 = vpack.c.b16 %v2248, %v2246
    %v2375 = vpack.c.b16 %v2251, %v2249
    %v2376 = vpack.c.b16 %v2252, %v2250
    %v2377 = vpack.c.b16 %v2255, %v2253
    %v2378 = vpack.c.b16 %v2256, %v2254
    %v2379 = vpack.c.b16 %v2259, %v2257
    %v2380 = vpack.c.b16 %v2260, %v2258
    %v2381 = vpack.c.b16 %v2263, %v2261
    %v2382 = vpack.c.b16 %v2264, %v2262
    %v2383 = vpack.c.b16 %v2267, %v2265
    %v2384 = vpack.c.b16 %v2268, %v2266
    %v2385 = vpack.c.b16 %v2271, %v2269
    %v2386 = vpack.c.b16 %v2272, %v2270
    %v2387 = vpack.c.b16 %v2275, %v2273
    %v2388 = vpack.c.b16 %v2276, %v2274
    %v2389 = vpack.c.b16 %v2279, %v2277
    %v2390 = vpack.c.b16 %v2280, %v2278
    %v2391 = vpack.c.b16 %v2283, %v2281
    %v2392 = vpack.c.b16 %v2284, %v2282
    %v2393 = vpack.c.b16 %v2287, %v2285
    %v2394 = vpack.c.b16 %v2288, %v2286
    %v2395 = vpack.c.b16 %v2291, %v2289
    %v2396 = vpack.c.b16 %v2292, %v2290
    %v2397 = vpack.c.b16 %v2295, %v2293
    %v2398 = vpack.c.b16 %v2296, %v2294
    %v2399 = vpack.c.b16 %v2299, %v2297
    %v2400 = vpack.c.b16 %v2300, %v2298
    %v2401 = vpack.c.b16 %v2303, %v2301
    %v2402 = vpack.c.b16 %v2304, %v2302
    %v2403 = vpack.c.b16 %v2307, %v2305
    %v2404 = vpack.c.b16 %v2308, %v2306
    %v2405 = vpack.c.b16 %v2311, %v2309
    %v2406 = vpack.c.b16 %v2312, %v2310
    %v2407 = vpack.c.b16 %v2315, %v2313
    %v2408 = vpack.c.b16 %v2316, %v2314
    %v2409 = vpack.c.b16 %v2319, %v2317
    %v2410 = vpack.c.b16 %v2320, %v2318
    %v2411 = vpack.c.b16 %v2323, %v2321
    %v2412 = vpack.c.b16 %v2324, %v2322
    %v2413 = vpack.c.b16 %v2327, %v2325
    %v2414 = vpack.c.b16 %v2328, %v2326
    %v2415 = vpack.c.b16 %v2331, %v2329
    %v2416 = vpack.c.b16 %v2332, %v2330
    %v2417 = vpack.c.b16 %v2335, %v2333
    %v2418 = vpack.c.b16 %v2336, %v2334
    %v2419 = vpack.c.b16 %v2339, %v2337
    %v2420 = vpack.c.b16 %v2340, %v2338
    %v2421 = vpack.c.b16 %v2343, %v2341
    %v2422 = vpack.c.b16 %v2344, %v2342
    %v2423 = vpack.c.b16 %v2347, %v2345
    %v2424 = vpack.c.b16 %v2348, %v2346
    %v2425 = vpack.c.b16 %v2351, %v2349
    %v2426 = vpack.c.b16 %v2352, %v2350
    %v2427 = vpack.c.b16 %v2355, %v2353
    %v2428 = vpack.c.b16 %v2356, %v2354
    %v2429 = vpack.c.b16 %v2359, %v2357
    %v2430 = vpack.c.b16 %v2360, %v2358
    %v2431 = vpack.c.b16 %v2363, %v2361
    %v2432 = vpack.c.b16 %v2364, %v2362
    %v2433 = vpack.c.b16 %v2367, %v2365
    %v2434 = vpack.c.b16 %v2368, %v2366
    %v2435 = vpack.c.b16 %v2371, %v2369
    %v2436 = vpack.c.b16 %v2372, %v2370
    %2501 = vmatpush.bf16.msra.mxu0 %v2387
    %2502 = vmatpush.bf16.msra.mxu0 %v2385
    %2503 = vmatpush.bf16.msra.mxu0 %v2383
    %2504 = vmatpush.bf16.msra.mxu0 %v2381
    %2505 = vmatpush.bf16.msra.mxu0 %v2379
    %2506 = vmatpush.bf16.msra.mxu0 %v2377
    %2507 = vmatpush.bf16.msra.mxu0 %v2375
    %2508 = vmatpush.bf16.msra.mxu0 %v2373
    %2509 = vmatmul.bf16.gmra.mxu0 %v2107
    %v2510 = vpop.f32.mrf.mxu0
    %v2511 = vadd.f32 %v2177, %v2510
    %v2512 = vpop.f32.mrf.mxu0
    %2513 = vdwg.mxu0
    %2514 = vmatpush.bf16.msra.mxu0 %v2403
    %2515 = vmatpush.bf16.msra.mxu0 %v2401
    %2516 = vmatpush.bf16.msra.mxu0 %v2399
    %2517 = vmatpush.bf16.msra.mxu0 %v2397
    %2518 = vmatpush.bf16.msra.mxu0 %v2395
    %2519 = vmatpush.bf16.msra.mxu0 %v2393
    %2520 = vmatpush.bf16.msra.mxu0 %v2391
    %2521 = vmatpush.bf16.msra.mxu0 %v2389
    %2522 = vmatmul.bf16.gmra.mxu0 %v2108
    %v2523 = vpop.f32.mrf.mxu0
    %v2524 = vadd.f32 %v2511, %v2523
    %v2525 = vpop.f32.mrf.mxu0
    %2526 = vdwg.mxu0
    %2527 = vmatpush.bf16.msra.mxu0 %v2419
    %2528 = vmatpush.bf16.msra.mxu0 %v2417
    %2529 = vmatpush.bf16.msra.mxu0 %v2415
    %2530 = vmatpush.bf16.msra.mxu0 %v2413
    %2531 = vmatpush.bf16.msra.mxu0 %v2411
    %2532 = vmatpush.bf16.msra.mxu0 %v2409
    %2533 = vmatpush.bf16.msra.mxu0 %v2407
    %2534 = vmatpush.bf16.msra.mxu0 %v2405
    %2535 = vmatmul.bf16.gmra.mxu0 %v2109
    %v2536 = vpop.f32.mrf.mxu0
    %v2537 = vadd.f32 %v2524, %v2536
    %v2538 = vpop.f32.mrf.mxu0
    %2539 = vdwg.mxu0
    %2540 = vmatpush.bf16.msra.mxu0 %v2435
    %2541 = vmatpush.bf16.msra.mxu0 %v2433
    %2542 = vmatpush.bf16.msra.mxu0 %v2431
    %2543 = vmatpush.bf16.msra.mxu0 %v2429
    %2544 = vmatpush.bf16.msra.mxu0 %v2427
    %2545 = vmatpush.bf16.msra.mxu0 %v2425
    %2546 = vmatpush.bf16.msra.mxu0 %v2423
    %2547 = vmatpush.bf16.msra.mxu0 %v2421
    %2548 = vmatmul.bf16.gmra.mxu0 %v2110
    %v2549 = vpop.f32.mrf.mxu0
    %v2550 = vadd.f32 %v2537, %v2549
    %v2551 = vpop.f32.mrf.mxu0
    %2552 = vdwg.mxu0
    %2553 = vmatpush.bf16.msra.mxu0 %v2388
    %2554 = vmatpush.bf16.msra.mxu0 %v2386
    %2555 = vmatpush.bf16.msra.mxu0 %v2384
    %2556 = vmatpush.bf16.msra.mxu0 %v2382
    %2557 = vmatpush.bf16.msra.mxu0 %v2380
    %2558 = vmatpush.bf16.msra.mxu0 %v2378
    %2559 = vmatpush.bf16.msra.mxu0 %v2376
    %2560 = vmatpush.bf16.msra.mxu0 %v2374
    %2561 = vmatmul.bf16.gmra.mxu0 %v2107
    %v2562 = vpop.f32.mrf.mxu0
    %v2563 = vadd.f32 %v2178, %v2562
    %v2564 = vpop.f32.mrf.mxu0
    %2565 = vdwg.mxu0
    %2566 = vmatpush.bf16.msra.mxu0 %v2404
    %2567 = vmatpush.bf16.msra.mxu0 %v2402
    %2568 = vmatpush.bf16.msra.mxu0 %v2400
    %2569 = vmatpush.bf16.msra.mxu0 %v2398
    %2570 = vmatpush.bf16.msra.mxu0 %v2396
    %2571 = vmatpush.bf16.msra.mxu0 %v2394
    %2572 = vmatpush.bf16.msra.mxu0 %v2392
    %2573 = vmatpush.bf16.msra.mxu0 %v2390
    %2574 = vmatmul.bf16.gmra.mxu0 %v2108
    %v2575 = vpop.f32.mrf.mxu0
    %v2576 = vadd.f32 %v2563, %v2575
    %v2577 = vpop.f32.mrf.mxu0
    %2578 = vdwg.mxu0
    %2579 = vmatpush.bf16.msra.mxu0 %v2420
    %2580 = vmatpush.bf16.msra.mxu0 %v2418
    %2581 = vmatpush.bf16.msra.mxu0 %v2416
    %2582 = vmatpush.bf16.msra.mxu0 %v2414
    %2583 = vmatpush.bf16.msra.mxu0 %v2412
    %2584 = vmatpush.bf16.msra.mxu0 %v2410
    %2585 = vmatpush.bf16.msra.mxu0 %v2408
    %2586 = vmatpush.bf16.msra.mxu0 %v2406
    %2587 = vmatmul.bf16.gmra.mxu0 %v2109
    %v2588 = vpop.f32.mrf.mxu0
    %v2589 = vadd.f32 %v2576, %v2588
    %v2590 = vpop.f32.mrf.mxu0
    %2591 = vdwg.mxu0
    %2592 = vmatpush.bf16.msra.mxu0 %v2436
    %2593 = vmatpush.bf16.msra.mxu0 %v2434
    %2594 = vmatpush.bf16.msra.mxu0 %v2432
    %2595 = vmatpush.bf16.msra.mxu0 %v2430
    %2596 = vmatpush.bf16.msra.mxu0 %v2428
    %2597 = vmatpush.bf16.msra.mxu0 %v2426
    %2598 = vmatpush.bf16.msra.mxu0 %v2424
    %2599 = vmatpush.bf16.msra.mxu0 %v2422
    %2600 = vmatmul.bf16.gmra.mxu0 %v2110
    %v2601 = vpop.f32.mrf.mxu0
    %v2602 = vadd.f32 %v2589, %v2601
    %v2603 = vpop.f32.mrf.mxu0
    %2604 = vdwg.mxu0
    %vm2605 = vcmp.gt.f32.partialorder %v2550, 0.0
    %vm2606 = vcmp.gt.f32.partialorder %v2602, 0.0
    %v2607 = vmul.f32 %v2550, 0.2
    %v2608 = vmul.f32 %v2602, 0.2
    %v2609 = vsel %vm2605, %v2550, %v2607
    %v2610 = vsel %vm2606, %v2602, %v2608
    %v2611 = vpack.c.bf16 %v2609, %v2609
    %v2612 = vpack.c.bf16 %v2610, %v2610
    %v2613 = vld [vmem:[#allocation10] sm:$0xf]
    %v2614 = vld [vmem:[#allocation10 + $0x4] sm:$0xf]
    %v2615 = vld [vmem:[#allocation10 + $0x8] sm:$0xf]
    %v2616 = vld [vmem:[#allocation10 + $0xc] sm:$0xf]
    %v2617 = vld [vmem:[#allocation10 + $0x10] sm:$0xf]
    %v2618 = vld [vmem:[#allocation10 + $0x14] sm:$0xf]
    %v2619 = vld [vmem:[#allocation10 + $0x18] sm:$0xf]
    %v2620 = vld [vmem:[#allocation10 + $0x1c] sm:$0xf]
    %v2621 = vld [vmem:[#allocation10 + $0x20] sm:$0xf]
    %v2622 = vld [vmem:[#allocation10 + $0x24] sm:$0xf]
    %v2623 = vld [vmem:[#allocation10 + $0x28] sm:$0xf]
    %v2624 = vld [vmem:[#allocation10 + $0x2c] sm:$0xf]
    %v2625 = vld [vmem:[#allocation10 + $0x30] sm:$0xf]
    %v2626 = vld [vmem:[#allocation10 + $0x34] sm:$0xf]
    %v2627 = vld [vmem:[#allocation10 + $0x38] sm:$0xf]
    %v2628 = vld [vmem:[#allocation10 + $0x3c] sm:$0xf]
    %v2629 = vld [vmem:[#allocation10 + $0x40] sm:$0xf]
    %v2630 = vld [vmem:[#allocation10 + $0x44] sm:$0xf]
    %v2631 = vld [vmem:[#allocation10 + $0x48] sm:$0xf]
    %v2632 = vld [vmem:[#allocation10 + $0x4c] sm:$0xf]
    %v2633 = vld [vmem:[#allocation10 + $0x50] sm:$0xf]
    %v2634 = vld [vmem:[#allocation10 + $0x54] sm:$0xf]
    %v2635 = vld [vmem:[#allocation10 + $0x58] sm:$0xf]
    %v2636 = vld [vmem:[#allocation10 + $0x5c] sm:$0xf]
    %v2637 = vld [vmem:[#allocation10 + $0x60] sm:$0xf]
    %v2638 = vld [vmem:[#allocation10 + $0x64] sm:$0xf]
    %v2639 = vld [vmem:[#allocation10 + $0x68] sm:$0xf]
    %v2640 = vld [vmem:[#allocation10 + $0x6c] sm:$0xf]
    %v2641 = vld [vmem:[#allocation10 + $0x70] sm:$0xf]
    %v2642 = vld [vmem:[#allocation10 + $0x74] sm:$0xf]
    %v2643 = vld [vmem:[#allocation10 + $0x78] sm:$0xf]
    %v2644 = vld [vmem:[#allocation10 + $0x7c] sm:$0xf]
    %v2645 = vld [vmem:[%s6] sm:$0x1]
    %v2647 = vperm.slane %v2645, 0
    %v2681 = vunpack.c.l.b16 %v2613
    %v2682 = vunpack.c.l.b16 %v2614
    %v2683 = vunpack.c.l.b16 %v2615
    %v2684 = vunpack.c.l.b16 %v2616
    %v2685 = vunpack.c.l.b16 %v2617
    %v2686 = vunpack.c.l.b16 %v2618
    %v2687 = vunpack.c.l.b16 %v2619
    %v2688 = vunpack.c.l.b16 %v2620
    %v2689 = vunpack.c.l.b16 %v2621
    %v2690 = vunpack.c.l.b16 %v2622
    %v2691 = vunpack.c.l.b16 %v2623
    %v2692 = vunpack.c.l.b16 %v2624
    %v2693 = vunpack.c.l.b16 %v2625
    %v2694 = vunpack.c.l.b16 %v2626
    %v2695 = vunpack.c.l.b16 %v2627
    %v2696 = vunpack.c.l.b16 %v2628
    %v2697 = vunpack.c.l.b16 %v2629
    %v2698 = vunpack.c.l.b16 %v2630
    %v2699 = vunpack.c.l.b16 %v2631
    %v2700 = vunpack.c.l.b16 %v2632
    %v2701 = vunpack.c.l.b16 %v2633
    %v2702 = vunpack.c.l.b16 %v2634
    %v2703 = vunpack.c.l.b16 %v2635
    %v2704 = vunpack.c.l.b16 %v2636
    %v2705 = vunpack.c.l.b16 %v2637
    %v2706 = vunpack.c.l.b16 %v2638
    %v2707 = vunpack.c.l.b16 %v2639
    %v2708 = vunpack.c.l.b16 %v2640
    %v2709 = vunpack.c.l.b16 %v2641
    %v2710 = vunpack.c.l.b16 %v2642
    %v2711 = vunpack.c.l.b16 %v2643
    %v2712 = vunpack.c.l.b16 %v2644
    %v2713 = vpack.c.b16 %v2682, %v2681
    %v2714 = vpack.c.b16 %v2684, %v2683
    %v2715 = vpack.c.b16 %v2686, %v2685
    %v2716 = vpack.c.b16 %v2688, %v2687
    %v2717 = vpack.c.b16 %v2690, %v2689
    %v2718 = vpack.c.b16 %v2692, %v2691
    %v2719 = vpack.c.b16 %v2694, %v2693
    %v2720 = vpack.c.b16 %v2696, %v2695
    %v2721 = vpack.c.b16 %v2698, %v2697
    %v2722 = vpack.c.b16 %v2700, %v2699
    %v2723 = vpack.c.b16 %v2702, %v2701
    %v2724 = vpack.c.b16 %v2704, %v2703
    %v2725 = vpack.c.b16 %v2706, %v2705
    %v2726 = vpack.c.b16 %v2708, %v2707
    %v2727 = vpack.c.b16 %v2710, %v2709
    %v2728 = vpack.c.b16 %v2712, %v2711
    %2745 = vmatpush.bf16.msra.mxu0 %v2720
    %2746 = vmatpush.bf16.msra.mxu0 %v2719
    %2747 = vmatpush.bf16.msra.mxu0 %v2718
    %2748 = vmatpush.bf16.msra.mxu0 %v2717
    %2749 = vmatpush.bf16.msra.mxu0 %v2716
    %2750 = vmatpush.bf16.msra.mxu0 %v2715
    %2751 = vmatpush.bf16.msra.mxu0 %v2714
    %2752 = vmatpush.bf16.msra.mxu0 %v2713
    %2753 = vmatmul.bf16.gmra.mxu0 %v2611
    %v2754 = vpop.f32.mrf.mxu0
    %v2755 = vadd.f32 %v2647, %v2754
    %v2756 = vpop.f32.mrf.mxu0
    %2757 = vdwg.mxu0
    %2758 = vmatpush.bf16.msra.mxu0 %v2728
    %2759 = vmatpush.bf16.msra.mxu0 %v2727
    %2760 = vmatpush.bf16.msra.mxu0 %v2726
    %2761 = vmatpush.bf16.msra.mxu0 %v2725
    %2762 = vmatpush.bf16.msra.mxu0 %v2724
    %2763 = vmatpush.bf16.msra.mxu0 %v2723
    %2764 = vmatpush.bf16.msra.mxu0 %v2722
    %2765 = vmatpush.bf16.msra.mxu0 %v2721
    %2766 = vmatmul.bf16.gmra.mxu0 %v2612
    %v2767 = vpop.f32.mrf.mxu0
    %v2768 = vadd.f32 %v2755, %v2767
    %v2769 = vpop.f32.mrf.mxu0
    %2770 = vdwg.mxu0
    %2771 = vst [vmem:[#allocation11] sm:$0xff] %v2768
    // Predicated region
    $region50: #{tpu_custom_call.1} parent=1 // pred_check
      _
    $region51: #{tpu_custom_call.1} parent=1 // pred_check_branch
      %2773 = sbr.rel (0) target = $region53
    $region52: #{tpu_custom_call.1} parent=1 // pred_region
      %2775 = vsyncadd [#allocation4], 0
      %s2777 = sshll.u32 [#allocation11], 4
      %s2778 = int_to_ptr.vmem [resolvable:$true] %s2777
      %s2779 = sshll.u32 %s7, 4
      %s2780 = int_to_ptr.hbm [resolvable:$true] %s2779
      %2782 = dma.vmem_to_hbm [thread:$0]  %s2778, 128, %s2780, [#allocation4]
    $region53: #{tpu_custom_call.1} parent=1 // pred_fallthru
      _
    // Predicated region
    $region54: #{tpu_custom_call.1} parent=1 // pred_check
      _
    $region55: #{tpu_custom_call.1} parent=1 // pred_check_branch
      %2784 = sbr.rel (0) target = $region57
    $region56: #{tpu_custom_call.1} parent=1 // pred_region
      %2786 = dma.done [#allocation4], 128
    $region57: #{tpu_custom_call.1} parent=1 // pred_fallthru
      _
    %2787 = vsyncpa [#allocation3], 1
    %2788 = vsyncpa [#allocation6], 1
    %2789 = vsyncpa [#allocation9], 1
    %2790 = vsyncpa [#allocation4], 1

</llo_original>
